<compile_context>
chip_gen: v6e
topology: v6e:2x2x1
jax: 0.10.0
libtpu: 0.0.40
codegen_flags: <defaults>
</compile_context>

<pallas_src>
import math
import functools

import jax
import jax.numpy as jnp
import numpy as np
from jax.experimental import pallas as pl
from jax.experimental.pallas import tpu as pltpu


MXU_DTYPE = jnp.bfloat16   # matmul-input dtype (accumulation stays f32)
ACT_DTYPE = jnp.bfloat16   # activation streaming dtype (HBM <-> VMEM)
GELU_APPROXIMATE = False   # True -> tanh GELU (EUP slot); kept exact-erf by
                           # default for parity with nn.GELU() (deviation ~1e-3).


def _layernorm(x, gamma, beta, eps=1e-5):
    mu = jnp.mean(x, axis=-1, keepdims=True)
    var = jnp.mean((x - mu) ** 2, axis=-1, keepdims=True)
    return (x - mu) * jax.lax.rsqrt(var + eps) * gamma + beta


def _gelu_exact(x):
    # nn.GELU() default = exact erf formulation, in f32.
    return 0.5 * x * (1.0 + jax.lax.erf(x * (1.0 / math.sqrt(2.0))))


def vit_block_kernel(
    x_ref,            # (1, N, D)      activations (ACT_DTYPE)
    g1_ref, b1_ref,   # (1, D)         layernorm1 gamma/beta (f32)
    wqkv_ref,         # (H, dh, 3*dh)  per-head fused QKV weight (bf16)
    bqkv_ref,         # (H, 1, 3*dh)   per-head fused QKV bias (f32)
    g2_ref, b2_ref,   # (1, D)         layernorm2 gamma/beta (f32)
    w1_ref, bm1_ref,  # (D, Dm) bf16, (1, Dm) f32
    w2_ref, bm2_ref,  # (Dm, D) bf16, (1, D) f32
    out_ref,          # (1, N, D)      (ACT_DTYPE)
    *, n_heads: int,
):
    x = x_ref[0].astype(jnp.float32)       # (N, D) f32 working copy
    N, D = x.shape
    H = n_heads
    dh = D // H

    # --- norm1 (f32 statistics) ---
    xn = _layernorm(x, g1_ref[0], b1_ref[0])

    # Heads-first view: a single (N,H,dh)->(H,N,dh) relayout feeds Q, K and V.
    xh = jnp.transpose(xn.reshape(N, H, dh), (1, 0, 2)).astype(MXU_DTYPE)

    # --- head-batched fused QKV projection (true per-head parameters) ---
    qkv = jnp.einsum('hnd,hde->hne', xh, wqkv_ref[...],
                     preferred_element_type=jnp.float32) + bqkv_ref[...]  # (H,N,3dh) f32
    q = qkv[..., 0 * dh:1 * dh] * (1.0 / math.sqrt(dh))   # 1/sqrt(dh) folded into Q
    k = qkv[..., 1 * dh:2 * dh]
    v = qkv[..., 2 * dh:3 * dh]

    # --- attention (MXU bf16 inputs, f32 accumulation, batch-leading einsums) ---
    scores = jnp.einsum('hnd,hmd->hnm',
                        q.astype(MXU_DTYPE), k.astype(MXU_DTYPE),
                        preferred_element_type=jnp.float32)   # (H, N, N)
    m = jnp.max(scores, axis=-1, keepdims=True)
    e = jnp.exp(scores - m)                                   # values in (0, 1]
    denom = jnp.sum(e, axis=-1, keepdims=True)                # (H, N, 1)
    ctx = jnp.einsum('hnm,hmd->hnd',
                     e.astype(MXU_DTYPE), v.astype(MXU_DTYPE),
                     preferred_element_type=jnp.float32)      # (H, N, dh)
    # Normalize after PV: H*N*dh multiplies instead of H*N^2; reciprocal on EUP.
    ctx = ctx * pl.reciprocal(denom, approx=True)
    msa = jnp.transpose(ctx, (1, 0, 2)).reshape(N, D)         # (N, D)

    # --- first residual ---
    out1 = x + msa

    # --- norm2 (PyTorch code adds norm2(out) as the residual, not out) ---
    ln2 = _layernorm(out1, g2_ref[0], b2_ref[0])

    # --- MLP (bf16 matmuls, f32 GELU) ---
    hdn = jnp.dot(ln2.astype(w1_ref.dtype), w1_ref[...],
                  preferred_element_type=jnp.float32) + bm1_ref[0]
    if GELU_APPROXIMATE:
        hdn = jax.nn.gelu(hdn, approximate=True)
    else:
        hdn = _gelu_exact(hdn)
    mlp = jnp.dot(hdn.astype(w2_ref.dtype), w2_ref[...],
                  preferred_element_type=jnp.float32) + bm2_ref[0]

    out_ref[0] = (ln2 + mlp).astype(out_ref.dtype)


def _vmem_budget_bytes(N, D, Dm, H, act_itemsize, mxu_itemsize):
    """Honest VMEM footprint estimate, capped at 90% of physical VMEM."""
    f32 = 4
    dh = D // H
    # Grid-invariant operands: single-buffered (pl.Buffered(1)).
    weights = (3 * D * dh + 2 * D * Dm) * mxu_itemsize \
        + (H * 3 * dh + 4 * D + Dm + D) * f32
    # Activation I/O blocks (x and out): double-buffered by the pipeline.
    io = 2 * 2 * N * D * act_itemsize
    # f32 intermediates alive inside one grid step (+50% slack for temporaries).
    interm = (N * D                    # xn
              + 2 * 3 * N * D          # qkv heads (+ relayout copy)
              + 2 * H * N * N          # scores + exp
              + 2 * N * D              # ctx + msa
              + 3 * N * D              # out1, ln2, mlp
              + N * Dm) * f32          # mlp hidden
    total = weights + io + int(1.5 * interm)
    try:
        cap = int(0.9 * pltpu.get_tpu_info().vmem_capacity_bytes)
    except Exception:
        cap = 48 << 20   # conservative fallback that fits v7x's 64 MiB / TC
    return int(min(max(total, 32 << 20), cap))


def vit_block_pallas(x, params, n_heads):
    B, N, D = x.shape
    H = n_heads
    dh = D // H
    Dm = params["w1"].shape[1]

    # Fuse per-head Q/K/V linears into one (H, dh, 3*dh) weight — the true
    # parameters (no block-diagonal densification / redundant MXU FLOPs).
    wqkv = jnp.concatenate(
        [params["wq"], params["wk"], params["wv"]], axis=-1).astype(MXU_DTYPE)
    bqkv = jnp.concatenate(
        [params["bq"], params["bk"], params["bv"]], axis=-1)[:, None, :]  # (H,1,3dh) f32

    w1 = params["w1"].astype(MXU_DTYPE)
    w2 = params["w2"].astype(MXU_DTYPE)

    def const_spec(shape):
        # Grid-invariant operand: constant index_map + single buffering.
        nd = len(shape)
        return pl.BlockSpec(shape, lambda b: (0,) * nd,
                            pipeline_mode=pl.Buffered(1))

    in_specs = [
        pl.BlockSpec((1, N, D), lambda b: (b, 0, 0)),   # x (double-buffered)
        const_spec((1, D)), const_spec((1, D)),         # norm1 gamma/beta
        const_spec((H, dh, 3 * dh)),                    # fused per-head QKV weight
        const_spec((H, 1, 3 * dh)),                     # fused per-head QKV bias
        const_spec((1, D)), const_spec((1, D)),         # norm2 gamma/beta
        const_spec((D, Dm)), const_spec((1, Dm)),       # mlp lin1
        const_spec((Dm, D)), const_spec((1, D)),        # mlp lin2
    ]

    return pl.pallas_call(
        functools.partial(vit_block_kernel, n_heads=H),
        out_shape=jax.ShapeDtypeStruct((B, N, D), ACT_DTYPE),
        grid_spec=pltpu.PrefetchScalarGridSpec(
            num_scalar_prefetch=0,
            grid=(B,),
            in_specs=in_specs,
            out_specs=pl.BlockSpec((1, N, D), lambda b: (b, 0, 0)),
        ),
        compiler_params=pltpu.CompilerParams(
            dimension_semantics=("parallel",),
            vmem_limit_bytes=_vmem_budget_bytes(
                N, D, Dm, H,
                jnp.dtype(ACT_DTYPE).itemsize, jnp.dtype(MXU_DTYPE).itemsize)),
    )(
        x.astype(ACT_DTYPE),
        params["g1"], params["b1"],
        wqkv, bqkv,
        params["g2"], params["b2"],
        w1, params["bm1"],
        w2, params["bm2"],
    )


def make_params(key, hidden_d, n_heads, mlp_ratio=4):
    dh = hidden_d // n_heads
    dm = mlp_ratio * hidden_d
    ks = jax.random.split(key, 10)

    def w(k, shape, fan_in):
        return (jax.random.normal(k, shape, jnp.float32) / np.sqrt(fan_in)).astype(jnp.float32)

    # nn.Linear weight is (out, in); we store (in, out) so the kernel does x @ W.
    return {
        "g1": jnp.ones((1, hidden_d), jnp.float32),
        "b1": jnp.zeros((1, hidden_d), jnp.float32),
        "wq": w(ks[0], (n_heads, dh, dh), dh),
        "bq": w(ks[1], (n_heads, dh), dh),
        "wk": w(ks[2], (n_heads, dh, dh), dh),
        "bk": w(ks[3], (n_heads, dh), dh),
        "wv": w(ks[4], (n_heads, dh, dh), dh),
        "bv": w(ks[5], (n_heads, dh), dh),
        "g2": jnp.ones((1, hidden_d), jnp.float32),
        "b2": jnp.zeros((1, hidden_d), jnp.float32),
        "w1": w(ks[6], (hidden_d, dm), hidden_d),
        "bm1": w(ks[7], (1, dm), hidden_d),
        "w2": w(ks[8], (dm, hidden_d), dm),
        "bm2": w(ks[9], (1, hidden_d), dm),
    }


def vit_block_ref(x, params, n_heads):
    """Pure-JAX f32 reference mirroring the PyTorch module exactly."""
    B, N, D = x.shape
    dh = D // n_heads

    def ln(v, g, b):
        mu = jnp.mean(v, -1, keepdims=True)
        var = jnp.mean((v - mu) ** 2, -1, keepdims=True)
        return (v - mu) / jnp.sqrt(var + 1e-5) * g + b

    xn = ln(x, params["g1"][0], params["b1"][0])
    outs = []
    for b in range(B):
        heads = []
        for h in range(n_heads):
            seq = xn[b, :, h * dh:(h + 1) * dh]
            q = seq @ params["wq"][h] + params["bq"][h]
            k = seq @ params["wk"][h] + params["bk"][h]
            v = seq @ params["wv"][h] + params["bv"][h]
            a = jax.nn.softmax(q @ k.T / math.sqrt(dh), axis=-1)
            heads.append(a @ v)
        outs.append(jnp.concatenate(heads, -1))
    msa = jnp.stack(outs, 0)
    out1 = x + msa
    ln2 = ln(out1, params["g2"][0], params["b2"][0])
    hdn = jax.nn.gelu(ln2 @ params["w1"] + params["bm1"][0], approximate=False)
    mlp = hdn @ params["w2"] + params["bm2"][0]
    return ln2 + mlp


if __name__ == "__main__":
    # Small demo shapes. NOTE (benchmarking): for real perf measurement use
    # lane-dense shapes (D multiple of 128, query tile multiple of 8/16) so the
    # output stores are unmasked; tiny D also hides VMEM-residency effects.
    B, N, hidden_d, n_heads = 2, 8, 32, 2

    key = jax.random.PRNGKey(0)
    kx, kp = jax.random.split(key)
    x = jax.random.normal(kx, (B, N, hidden_d), jnp.float32)
    params = make_params(kp, hidden_d, n_heads)

    out = vit_block_pallas(x, params, n_heads)
    out = jax.block_until_ready(out)

    ref = vit_block_ref(x, params, n_heads)
    # Loosened tolerance: bf16 activation streaming + bf16 matmul inputs
    # (f32 accumulation) + approx reciprocal in softmax vs a pure-f32 reference.
    out_f32 = np.asarray(out.astype(jnp.float32))
    np.testing.assert_allclose(out_f32, np.asarray(ref), rtol=5e-2, atol=5e-2)

    print("KERNEL_OK")
</pallas_src>

<mosaic_0001>
module attributes {stable_mosaic.version = 11 : i64} {
  func.func @vit_block_kernel(%arg0: i32, %arg1: memref<1x8x32xbf16, #tpu.memory_space<vmem>>, %arg2: memref<1x32xf32, #tpu.memory_space<vmem>>, %arg3: memref<1x32xf32, #tpu.memory_space<vmem>>, %arg4: memref<2x16x48xbf16, #tpu.memory_space<vmem>>, %arg5: memref<2x1x48xf32, #tpu.memory_space<vmem>>, %arg6: memref<1x32xf32, #tpu.memory_space<vmem>>, %arg7: memref<1x32xf32, #tpu.memory_space<vmem>>, %arg8: memref<32x128xbf16, #tpu.memory_space<vmem>>, %arg9: memref<1x128xf32, #tpu.memory_space<vmem>>, %arg10: memref<128x32xbf16, #tpu.memory_space<vmem>>, %arg11: memref<1x32xf32, #tpu.memory_space<vmem>>, %arg12: memref<1x8x32xbf16, #tpu.memory_space<vmem>>) attributes {dimension_semantics = [#tpu.dimension_semantics<parallel>], iteration_bounds = array<i64: 2>, scalar_prefetch = 0 : i64, scratch_operands = 0 : i64, tpu.core_type = #tpu.core_type<tc>, window_params = [{transform_indices = @transform_0, window_bounds = array<i64: 1, 8, 32>}, {pipeline_mode = #tpu.pipeline_mode<synchronous>, transform_indices = @transform_1, window_bounds = array<i64: 1, 32>}, {pipeline_mode = #tpu.pipeline_mode<synchronous>, transform_indices = @transform_2, window_bounds = array<i64: 1, 32>}, {pipeline_mode = #tpu.pipeline_mode<synchronous>, transform_indices = @transform_3, window_bounds = array<i64: 2, 16, 48>}, {pipeline_mode = #tpu.pipeline_mode<synchronous>, transform_indices = @transform_4, window_bounds = array<i64: 2, 1, 48>}, {pipeline_mode = #tpu.pipeline_mode<synchronous>, transform_indices = @transform_5, window_bounds = array<i64: 1, 32>}, {pipeline_mode = #tpu.pipeline_mode<synchronous>, transform_indices = @transform_6, window_bounds = array<i64: 1, 32>}, {pipeline_mode = #tpu.pipeline_mode<synchronous>, transform_indices = @transform_7, window_bounds = array<i64: 32, 128>}, {pipeline_mode = #tpu.pipeline_mode<synchronous>, transform_indices = @transform_8, window_bounds = array<i64: 1, 128>}, {pipeline_mode = #tpu.pipeline_mode<synchronous>, transform_indices = @transform_9, window_bounds = array<i64: 128, 32>}, {pipeline_mode = #tpu.pipeline_mode<synchronous>, transform_indices = @transform_10, window_bounds = array<i64: 1, 32>}, {transform_indices = @transform_11, window_bounds = array<i64: 1, 8, 32>}]} {
    %c0 = arith.constant 0 : index
    %c0_0 = arith.constant 0 : index
    %c0_1 = arith.constant 0 : index
    %0 = vector.load %arg1[%c0, %c0_0, %c0_1] : memref<1x8x32xbf16, #tpu.memory_space<vmem>>, vector<1x8x32xbf16>
    %1 = vector.shape_cast %0 : vector<1x8x32xbf16> to vector<8x32xbf16>
    %2 = arith.extf %1 : vector<8x32xbf16> to vector<8x32xf32>
    %c0_2 = arith.constant 0 : index
    %c0_3 = arith.constant 0 : index
    %3 = vector.load %arg2[%c0_2, %c0_3] : memref<1x32xf32, #tpu.memory_space<vmem>>, vector<1x32xf32>
    %4 = vector.shape_cast %3 : vector<1x32xf32> to vector<32xf32>
    %c0_4 = arith.constant 0 : index
    %c0_5 = arith.constant 0 : index
    %5 = vector.load %arg3[%c0_4, %c0_5] : memref<1x32xf32, #tpu.memory_space<vmem>>, vector<1x32xf32>
    %6 = vector.shape_cast %5 : vector<1x32xf32> to vector<32xf32>
    %cst = arith.constant dense<0.000000e+00> : vector<8xf32>
    %7 = vector.multi_reduction <add>, %2, %cst [1] : vector<8x32xf32> to vector<8xf32>
    %8 = vector.shape_cast %7 : vector<8xf32> to vector<8x1xf32>
    %cst_6 = arith.constant 3.200000e+01 : f32
    %9 = vector.broadcast %cst_6 : f32 to vector<8x1xf32>
    %10 = arith.divf %8, %9 : vector<8x1xf32>
    %11 = vector.broadcast %10 : vector<8x1xf32> to vector<8x32xf32>
    %12 = arith.subf %2, %11 : vector<8x32xf32>
    %13 = arith.mulf %12, %12 : vector<8x32xf32>
    %cst_7 = arith.constant dense<0.000000e+00> : vector<8xf32>
    %14 = vector.multi_reduction <add>, %13, %cst_7 [1] : vector<8x32xf32> to vector<8xf32>
    %15 = vector.shape_cast %14 : vector<8xf32> to vector<8x1xf32>
    %cst_8 = arith.constant 3.200000e+01 : f32
    %16 = vector.broadcast %cst_8 : f32 to vector<8x1xf32>
    %17 = arith.divf %15, %16 : vector<8x1xf32>
    %18 = vector.broadcast %10 : vector<8x1xf32> to vector<8x32xf32>
    %19 = arith.subf %2, %18 : vector<8x32xf32>
    %cst_9 = arith.constant 9.99999974E-6 : f32
    %20 = vector.broadcast %cst_9 : f32 to vector<8x1xf32>
    %21 = arith.addf %17, %20 : vector<8x1xf32>
    %22 = math.rsqrt %21 : vector<8x1xf32>
    %23 = vector.broadcast %22 : vector<8x1xf32> to vector<8x32xf32>
    %24 = arith.mulf %19, %23 : vector<8x32xf32>
    %25 = vector.shape_cast %4 : vector<32xf32> to vector<1x32xf32>
    %26 = vector.broadcast %25 : vector<1x32xf32> to vector<8x32xf32>
    %27 = arith.mulf %24, %26 : vector<8x32xf32>
    %28 = vector.shape_cast %6 : vector<32xf32> to vector<1x32xf32>
    %29 = vector.broadcast %28 : vector<1x32xf32> to vector<8x32xf32>
    %30 = arith.addf %27, %29 : vector<8x32xf32>
    %31 = vector.shape_cast %30 : vector<8x32xf32> to vector<8x2x16xf32>
    %32 = tpu.transpose %31, [1, 0, 2] : vector<8x2x16xf32> -> vector<2x8x16xf32>
    %33 = arith.truncf %32 : vector<2x8x16xf32> to vector<2x8x16xbf16>
    %c0_10 = arith.constant 0 : index
    %c0_11 = arith.constant 0 : index
    %c0_12 = arith.constant 0 : index
    %34 = vector.load %arg4[%c0_10, %c0_11, %c0_12] : memref<2x16x48xbf16, #tpu.memory_space<vmem>>, vector<2x16x48xbf16>
    "tpu.trace_start"() <{level = 10 : i32, message = "hnd,hde->hne"}> : () -> ()
    %cst_13 = arith.constant dense<0.000000e+00> : vector<2x8x48xf32>
    %35 = tpu.matmul %33, %34, %cst_13 {dimension_numbers = #tpu.dot_dimension_numbers<[2], [1], [1], [2], [0, 0, 0, 1, 1, 2], [0], [0]>} : vector<2x8x16xbf16>, vector<2x16x48xbf16>, vector<2x8x48xf32> -> vector<2x8x48xf32>
    "tpu.trace_stop"() : () -> ()
    %c0_14 = arith.constant 0 : index
    %c0_15 = arith.constant 0 : index
    %c0_16 = arith.constant 0 : index
    %36 = vector.load %arg5[%c0_14, %c0_15, %c0_16] : memref<2x1x48xf32, #tpu.memory_space<vmem>>, vector<2x1x48xf32>
    %37 = vector.broadcast %36 : vector<2x1x48xf32> to vector<2x8x48xf32>
    %38 = arith.addf %35, %37 : vector<2x8x48xf32>
    %39 = vector.extract_strided_slice %38 {offsets = [0, 0, 0], sizes = [2, 8, 16], strides = [1, 1, 1]} : vector<2x8x48xf32> to vector<2x8x16xf32>
    %cst_17 = arith.constant 2.500000e-01 : f32
    %40 = vector.broadcast %cst_17 : f32 to vector<2x8x16xf32>
    %41 = arith.mulf %39, %40 : vector<2x8x16xf32>
    %42 = vector.extract_strided_slice %38 {offsets = [0, 0, 16], sizes = [2, 8, 16], strides = [1, 1, 1]} : vector<2x8x48xf32> to vector<2x8x16xf32>
    %43 = vector.extract_strided_slice %38 {offsets = [0, 0, 32], sizes = [2, 8, 16], strides = [1, 1, 1]} : vector<2x8x48xf32> to vector<2x8x16xf32>
    %44 = arith.truncf %41 : vector<2x8x16xf32> to vector<2x8x16xbf16>
    %45 = arith.truncf %42 : vector<2x8x16xf32> to vector<2x8x16xbf16>
    "tpu.trace_start"() <{level = 10 : i32, message = "hnd,hmd->hnm"}> : () -> ()
    %cst_18 = arith.constant dense<0.000000e+00> : vector<2x8x8xf32>
    %46 = tpu.matmul %44, %45, %cst_18 {dimension_numbers = #tpu.dot_dimension_numbers<[2], [2], [1], [1], [0, 0, 0, 1, 1, 1], [0], [0]>} : vector<2x8x16xbf16>, vector<2x8x16xbf16>, vector<2x8x8xf32> -> vector<2x8x8xf32>
    "tpu.trace_stop"() : () -> ()
    %cst_19 = arith.constant dense<0xFF800000> : vector<2x8xf32>
    %47 = vector.multi_reduction <maximumf>, %46, %cst_19 [2] : vector<2x8x8xf32> to vector<2x8xf32>
    %48 = vector.shape_cast %47 : vector<2x8xf32> to vector<2x8x1xf32>
    %49 = vector.broadcast %48 : vector<2x8x1xf32> to vector<2x8x8xf32>
    %50 = arith.subf %46, %49 : vector<2x8x8xf32>
    %51 = math.exp %50 : vector<2x8x8xf32>
    %cst_20 = arith.constant dense<0.000000e+00> : vector<2x8xf32>
    %52 = vector.multi_reduction <add>, %51, %cst_20 [2] : vector<2x8x8xf32> to vector<2x8xf32>
    %53 = vector.shape_cast %52 : vector<2x8xf32> to vector<2x8x1xf32>
    %54 = arith.truncf %51 : vector<2x8x8xf32> to vector<2x8x8xbf16>
    %55 = arith.truncf %43 : vector<2x8x16xf32> to vector<2x8x16xbf16>
    "tpu.trace_start"() <{level = 10 : i32, message = "hnm,hmd->hnd"}> : () -> ()
    %cst_21 = arith.constant dense<0.000000e+00> : vector<2x8x16xf32>
    %56 = tpu.matmul %54, %55, %cst_21 {dimension_numbers = #tpu.dot_dimension_numbers<[2], [1], [1], [2], [0, 0, 0, 1, 1, 2], [0], [0]>} : vector<2x8x8xbf16>, vector<2x8x16xbf16>, vector<2x8x16xf32> -> vector<2x8x16xf32>
    "tpu.trace_stop"() : () -> ()
    %57 = tpu.reciprocal %53 {approx = true} : vector<2x8x1xf32> -> vector<2x8x1xf32>
    %58 = vector.broadcast %57 : vector<2x8x1xf32> to vector<2x8x16xf32>
    %59 = arith.mulf %56, %58 : vector<2x8x16xf32>
    %60 = tpu.transpose %59, [1, 0, 2] : vector<2x8x16xf32> -> vector<8x2x16xf32>
    %61 = vector.shape_cast %60 : vector<8x2x16xf32> to vector<8x32xf32>
    %62 = arith.addf %2, %61 : vector<8x32xf32>
    %c0_22 = arith.constant 0 : index
    %c0_23 = arith.constant 0 : index
    %63 = vector.load %arg6[%c0_22, %c0_23] : memref<1x32xf32, #tpu.memory_space<vmem>>, vector<1x32xf32>
    %64 = vector.shape_cast %63 : vector<1x32xf32> to vector<32xf32>
    %c0_24 = arith.constant 0 : index
    %c0_25 = arith.constant 0 : index
    %65 = vector.load %arg7[%c0_24, %c0_25] : memref<1x32xf32, #tpu.memory_space<vmem>>, vector<1x32xf32>
    %66 = vector.shape_cast %65 : vector<1x32xf32> to vector<32xf32>
    %cst_26 = arith.constant dense<0.000000e+00> : vector<8xf32>
    %67 = vector.multi_reduction <add>, %62, %cst_26 [1] : vector<8x32xf32> to vector<8xf32>
    %68 = vector.shape_cast %67 : vector<8xf32> to vector<8x1xf32>
    %cst_27 = arith.constant 3.200000e+01 : f32
    %69 = vector.broadcast %cst_27 : f32 to vector<8x1xf32>
    %70 = arith.divf %68, %69 : vector<8x1xf32>
    %71 = vector.broadcast %70 : vector<8x1xf32> to vector<8x32xf32>
    %72 = arith.subf %62, %71 : vector<8x32xf32>
    %73 = arith.mulf %72, %72 : vector<8x32xf32>
    %cst_28 = arith.constant dense<0.000000e+00> : vector<8xf32>
    %74 = vector.multi_reduction <add>, %73, %cst_28 [1] : vector<8x32xf32> to vector<8xf32>
    %75 = vector.shape_cast %74 : vector<8xf32> to vector<8x1xf32>
    %cst_29 = arith.constant 3.200000e+01 : f32
    %76 = vector.broadcast %cst_29 : f32 to vector<8x1xf32>
    %77 = arith.divf %75, %76 : vector<8x1xf32>
    %78 = vector.broadcast %70 : vector<8x1xf32> to vector<8x32xf32>
    %79 = arith.subf %62, %78 : vector<8x32xf32>
    %cst_30 = arith.constant 9.99999974E-6 : f32
    %80 = vector.broadcast %cst_30 : f32 to vector<8x1xf32>
    %81 = arith.addf %77, %80 : vector<8x1xf32>
    %82 = math.rsqrt %81 : vector<8x1xf32>
    %83 = vector.broadcast %82 : vector<8x1xf32> to vector<8x32xf32>
    %84 = arith.mulf %79, %83 : vector<8x32xf32>
    %85 = vector.shape_cast %64 : vector<32xf32> to vector<1x32xf32>
    %86 = vector.broadcast %85 : vector<1x32xf32> to vector<8x32xf32>
    %87 = arith.mulf %84, %86 : vector<8x32xf32>
    %88 = vector.shape_cast %66 : vector<32xf32> to vector<1x32xf32>
    %89 = vector.broadcast %88 : vector<1x32xf32> to vector<8x32xf32>
    %90 = arith.addf %87, %89 : vector<8x32xf32>
    %91 = arith.truncf %90 : vector<8x32xf32> to vector<8x32xbf16>
    %c0_31 = arith.constant 0 : index
    %c0_32 = arith.constant 0 : index
    %92 = vector.load %arg8[%c0_31, %c0_32] : memref<32x128xbf16, #tpu.memory_space<vmem>>, vector<32x128xbf16>
    %cst_33 = arith.constant dense<0.000000e+00> : vector<8x128xf32>
    %93 = tpu.matmul %91, %92, %cst_33 {dimension_numbers = #tpu.dot_dimension_numbers<[1], [0], [0], [1], [0, 0, 1, 1], [], []>} : vector<8x32xbf16>, vector<32x128xbf16>, vector<8x128xf32> -> vector<8x128xf32>
    %c0_34 = arith.constant 0 : index
    %c0_35 = arith.constant 0 : index
    %94 = vector.load %arg9[%c0_34, %c0_35] : memref<1x128xf32, #tpu.memory_space<vmem>>, vector<1x128xf32>
    %95 = vector.shape_cast %94 : vector<1x128xf32> to vector<128xf32>
    %96 = vector.shape_cast %95 : vector<128xf32> to vector<1x128xf32>
    %97 = vector.broadcast %96 : vector<1x128xf32> to vector<8x128xf32>
    %98 = arith.addf %93, %97 : vector<8x128xf32>
    %cst_36 = arith.constant 5.000000e-01 : f32
    %99 = vector.broadcast %cst_36 : f32 to vector<8x128xf32>
    %100 = arith.mulf %99, %98 : vector<8x128xf32>
    %cst_37 = arith.constant 0.707106769 : f32
    %101 = vector.broadcast %cst_37 : f32 to vector<8x128xf32>
    %102 = arith.mulf %98, %101 : vector<8x128xf32>
    %103 = math.erf %102 : vector<8x128xf32>
    %cst_38 = arith.constant 1.000000e+00 : f32
    %104 = vector.broadcast %cst_38 : f32 to vector<8x128xf32>
    %105 = arith.addf %104, %103 : vector<8x128xf32>
    %106 = arith.mulf %100, %105 : vector<8x128xf32>
    %107 = arith.truncf %106 : vector<8x128xf32> to vector<8x128xbf16>
    %c0_39 = arith.constant 0 : index
    %c0_40 = arith.constant 0 : index
    %108 = vector.load %arg10[%c0_39, %c0_40] : memref<128x32xbf16, #tpu.memory_space<vmem>>, vector<128x32xbf16>
    %cst_41 = arith.constant dense<0.000000e+00> : vector<8x32xf32>
    %109 = tpu.matmul %107, %108, %cst_41 {dimension_numbers = #tpu.dot_dimension_numbers<[1], [0], [0], [1], [0, 0, 1, 1], [], []>} : vector<8x128xbf16>, vector<128x32xbf16>, vector<8x32xf32> -> vector<8x32xf32>
    %c0_42 = arith.constant 0 : index
    %c0_43 = arith.constant 0 : index
    %110 = vector.load %arg11[%c0_42, %c0_43] : memref<1x32xf32, #tpu.memory_space<vmem>>, vector<1x32xf32>
    %111 = vector.shape_cast %110 : vector<1x32xf32> to vector<32xf32>
    %112 = vector.shape_cast %111 : vector<32xf32> to vector<1x32xf32>
    %113 = vector.broadcast %112 : vector<1x32xf32> to vector<8x32xf32>
    %114 = arith.addf %109, %113 : vector<8x32xf32>
    %115 = arith.addf %90, %114 : vector<8x32xf32>
    %116 = arith.truncf %115 : vector<8x32xf32> to vector<8x32xbf16>
    %c0_44 = arith.constant 0 : index
    %c0_45 = arith.constant 0 : index
    %c0_46 = arith.constant 0 : index
    %117 = vector.load %arg12[%c0_44, %c0_45, %c0_46] : memref<1x8x32xbf16, #tpu.memory_space<vmem>>, vector<1x8x32xbf16>
    %118 = vector.shape_cast %117 : vector<1x8x32xbf16> to vector<8x32xbf16>
    %119 = vector.shape_cast %116 : vector<8x32xbf16> to vector<1x8x32xbf16>
    tpu.vector_store %arg12[%c0_44, %c0_45, %c0_46], %119 {strides = array<i32>} : memref<1x8x32xbf16, #tpu.memory_space<vmem>>, vector<1x8x32xbf16>,
    return
  }
  func.func @transform_0(%arg0: i32) -> (i32, i32, i32) {
    %c0_i32 = arith.constant 0 : i32
    %c0_i32_0 = arith.constant 0 : i32
    %c0_i32_1 = arith.constant 0 : i32
    return %arg0, %c0_i32, %c0_i32_0 : i32, i32, i32
  }
  func.func @transform_1(%arg0: i32) -> (i32, i32) {
    %c0_i32 = arith.constant 0 : i32
    %c0_i32_0 = arith.constant 0 : i32
    %c0_i32_1 = arith.constant 0 : i32
    return %c0_i32, %c0_i32_0 : i32, i32
  }
  func.func @transform_2(%arg0: i32) -> (i32, i32) {
    %c0_i32 = arith.constant 0 : i32
    %c0_i32_0 = arith.constant 0 : i32
    %c0_i32_1 = arith.constant 0 : i32
    return %c0_i32, %c0_i32_0 : i32, i32
  }
  func.func @transform_3(%arg0: i32) -> (i32, i32, i32) {
    %c0_i32 = arith.constant 0 : i32
    %c0_i32_0 = arith.constant 0 : i32
    %c0_i32_1 = arith.constant 0 : i32
    %c0_i32_2 = arith.constant 0 : i32
    return %c0_i32, %c0_i32_0, %c0_i32_1 : i32, i32, i32
  }
  func.func @transform_4(%arg0: i32) -> (i32, i32, i32) {
    %c0_i32 = arith.constant 0 : i32
    %c0_i32_0 = arith.constant 0 : i32
    %c0_i32_1 = arith.constant 0 : i32
    %c0_i32_2 = arith.constant 0 : i32
    return %c0_i32, %c0_i32_0, %c0_i32_1 : i32, i32, i32
  }
  func.func @transform_5(%arg0: i32) -> (i32, i32) {
    %c0_i32 = arith.constant 0 : i32
    %c0_i32_0 = arith.constant 0 : i32
    %c0_i32_1 = arith.constant 0 : i32
    return %c0_i32, %c0_i32_0 : i32, i32
  }
  func.func @transform_6(%arg0: i32) -> (i32, i32) {
    %c0_i32 = arith.constant 0 : i32
    %c0_i32_0 = arith.constant 0 : i32
    %c0_i32_1 = arith.constant 0 : i32
    return %c0_i32, %c0_i32_0 : i32, i32
  }
  func.func @transform_7(%arg0: i32) -> (i32, i32) {
    %c0_i32 = arith.constant 0 : i32
    %c0_i32_0 = arith.constant 0 : i32
    %c0_i32_1 = arith.constant 0 : i32
    return %c0_i32, %c0_i32_0 : i32, i32
  }
  func.func @transform_8(%arg0: i32) -> (i32, i32) {
    %c0_i32 = arith.constant 0 : i32
    %c0_i32_0 = arith.constant 0 : i32
    %c0_i32_1 = arith.constant 0 : i32
    return %c0_i32, %c0_i32_0 : i32, i32
  }
  func.func @transform_9(%arg0: i32) -> (i32, i32) {
    %c0_i32 = arith.constant 0 : i32
    %c0_i32_0 = arith.constant 0 : i32
    %c0_i32_1 = arith.constant 0 : i32
    return %c0_i32, %c0_i32_0 : i32, i32
  }
  func.func @transform_10(%arg0: i32) -> (i32, i32) {
    %c0_i32 = arith.constant 0 : i32
    %c0_i32_0 = arith.constant 0 : i32
    %c0_i32_1 = arith.constant 0 : i32
    return %c0_i32, %c0_i32_0 : i32, i32
  }
  func.func @transform_11(%arg0: i32) -> (i32, i32, i32) {
    %c0_i32 = arith.constant 0 : i32
    %c0_i32_0 = arith.constant 0 : i32
    %c0_i32_1 = arith.constant 0 : i32
    return %arg0, %c0_i32, %c0_i32_0 : i32, i32, i32
  }
}

</mosaic_0001>

<llo_original>
// kernel: tpu_custom_call.1
$region0: #{tpu_custom_call.1}
  #allocation0 [shape = 'u32[]', space=smem, size = 0x4, offset = 0x4, fixed_abs, tag = 'smem constant byte address 0x4 - core index']
  #allocation1 [shape = 'u32[144,128]{1,0:T(1,128)}', space=vmem, size = 0x12000, scoped, tag = 'internal scratch']
  %s0 = inlined_call_operand.vmem [shape: bf16[2,8,32], index: 0, kind: input, shape index: {}]
  %s1 = inlined_call_operand.vmem [shape: f32[1,32], index: 1, kind: input, shape index: {}]
  %s2 = inlined_call_operand.vmem [shape: f32[1,32], index: 2, kind: input, shape index: {}]
  %s3 = inlined_call_operand.vmem [shape: bf16[2,16,48], index: 3, kind: input, shape index: {}]
  %s4 = inlined_call_operand.vmem [shape: f32[2,1,48], index: 4, kind: input, shape index: {}]
  %s5 = inlined_call_operand.vmem [shape: f32[1,32], index: 5, kind: input, shape index: {}]
  %s6 = inlined_call_operand.vmem [shape: f32[1,32], index: 6, kind: input, shape index: {}]
  %s7 = inlined_call_operand.vmem [shape: bf16[32,128], index: 7, kind: input, shape index: {}]
  %s8 = inlined_call_operand.vmem [shape: f32[1,128], index: 8, kind: input, shape index: {}]
  %s9 = inlined_call_operand.vmem [shape: bf16[128,32], index: 9, kind: input, shape index: {}]
  %s10 = inlined_call_operand.vmem [shape: f32[1,32], index: 10, kind: input, shape index: {}]
  %s11 = inlined_call_operand.hbm [shape: bf16[2,8,32], index: 11, kind: output, shape index: {}]
  %s12 = sld [smem:[#allocation0]]
  $region77: #{tpu_custom_call.1} parent=0
    _
  %s14 = ssub.s32 1, %s12
  %s15 = scalar_select 0, %s14, %s12
  $region1: #{tpu_custom_call.1} parent=0
    #allocation2 [shape = 'u8[4096]{0}', space=vmem, size = 0x1000, scoped, tag = 'output window, operand 0']
    #allocation3 [shape = 's32[2]{0}', space=sflag, size = 0x8, scoped, tag = 'scoped memory for tpu_custom_call.1']
    %16 = vsyncpa [#allocation3], 0
    %s17 = scalar_lea.sflag [#allocation3], 1
    %18 = vsyncpa %s17, 0
    loop: start=0, step=1, limit=4
    $region2: #{tpu_custom_call.1} parent=1 // loop_pre_header
      _
    $region3: #{tpu_custom_call.1} parent=1 // loop_header
      %s20 = sphi 0, %s24
      %p21 = scmp.ge.s32.totalorder %s20, 4
      %s30 = sphi 0, %s32
      %s33 = sphi 0, %s30
      %s34 = sphi 0, %s33
      %s50 = sphi 0, %s34
      %s54 = sphi 0, %s54
      %s56 = sphi 0, %s54
      %s57 = sphi 0, %s56
      %s71 = sphi 0, %s57
      %s75 = sphi 0, %s75
      %s77 = sphi 0, %s75
      %s78 = sphi 0, %s77
      %s92 = sphi 0, %s78
      %s96 = sphi 0, %s96
      %s98 = sphi 0, %s96
      %s99 = sphi 0, %s98
      %s113 = sphi 0, %s99
      %s117 = sphi 0, %s117
      %s119 = sphi 0, %s117
      %s120 = sphi 0, %s119
      %s134 = sphi 0, %s120
      %s138 = sphi 0, %s138
      %s140 = sphi 0, %s138
      %s141 = sphi 0, %s140
      %s155 = sphi 0, %s141
      %s159 = sphi 0, %s159
      %s161 = sphi 0, %s159
      %s162 = sphi 0, %s161
      %s176 = sphi 0, %s162
      %s180 = sphi 0, %s180
      %s182 = sphi 0, %s180
      %s183 = sphi 0, %s182
      %s197 = sphi 0, %s183
      %s201 = sphi 0, %s201
      %s203 = sphi 0, %s201
      %s204 = sphi 0, %s203
      %s218 = sphi 0, %s204
      %s222 = sphi 0, %s222
      %s224 = sphi 0, %s222
      %s225 = sphi 0, %s224
      %s239 = sphi 0, %s225
      %s243 = sphi 0, %s243
      %s245 = sphi 0, %s243
      %s246 = sphi 0, %s245
      %s260 = sphi 0, %s246
      %s266 = sphi 0, %s268
      %s269 = sphi 0, %s266
      %s270 = sphi 0, %s269
      %s286 = sphi 0, %s270
    $region4: #{tpu_custom_call.1} parent=1 // loop_header_branch
      %23 = sbr.rel (%p21) target = $region8
    $region5: #{tpu_custom_call.1} parent=1 // loop_body
      %s25 = ssub.s32 %s20, 1
      %s26 = ssub.s32 %s20, 2
      %s27 = sadd.s32 %s20, 1
      %s28 = ssub.s32 %s20, %s27
      %p29 = scmp.eq.s32.totalorder %s28, 0
      %s31 = sadd.s32 %s30, 1
      %s32 = scalar_select %p29, %s30, %s31
      %p35 = pneg %p29
      %p36 = scmp.eq.s32.totalorder %s20, 1
      %p37 = por %p35, %p36
      %p38 = scmp.ne.s32.totalorder %s30, %s33
      %p39 = scmp.eq.s32.totalorder %s20, 0
      %p40 = por %p38, %p39
      %p41 = scmp.ne.s32.totalorder %s30, %s33
      %p42 = scmp.eq.s32.totalorder %s25, 1
      %p43 = por %p41, %p42
      %p44 = scmp.ne.s32.totalorder %s33, %s34
      %p45 = scmp.eq.s32.totalorder %s25, 0
      %p46 = por %p44, %p45
      %p47 = scmp.ne.s32.totalorder %s33, %s34
      %p48 = scmp.eq.s32.totalorder %s26, 1
      %p49 = por %p47, %p48
      %p51 = scmp.ne.s32.totalorder %s34, %s50
      %p52 = scmp.eq.s32.totalorder %s26, 0
      %p53 = por %p51, %p52
      %s55 = sadd.s32 %s54, 1
      %p58 = scmp.eq.s32.totalorder %s20, 1
      %p59 = scmp.ne.s32.totalorder %s54, %s56
      %p60 = scmp.eq.s32.totalorder %s20, 0
      %p61 = por %p59, %p60
      %p62 = scmp.ne.s32.totalorder %s54, %s56
      %p63 = scmp.eq.s32.totalorder %s25, 1
      %p64 = por %p62, %p63
      %p65 = scmp.ne.s32.totalorder %s56, %s57
      %p66 = scmp.eq.s32.totalorder %s25, 0
      %p67 = por %p65, %p66
      %p68 = scmp.ne.s32.totalorder %s56, %s57
      %p69 = scmp.eq.s32.totalorder %s26, 1
      %p70 = por %p68, %p69
      %p72 = scmp.ne.s32.totalorder %s57, %s71
      %p73 = scmp.eq.s32.totalorder %s26, 0
      %p74 = por %p72, %p73
      %s76 = sadd.s32 %s75, 1
      %p79 = scmp.eq.s32.totalorder %s20, 1
      %p80 = scmp.ne.s32.totalorder %s75, %s77
      %p81 = scmp.eq.s32.totalorder %s20, 0
      %p82 = por %p80, %p81
      %p83 = scmp.ne.s32.totalorder %s75, %s77
      %p84 = scmp.eq.s32.totalorder %s25, 1
      %p85 = por %p83, %p84
      %p86 = scmp.ne.s32.totalorder %s77, %s78
      %p87 = scmp.eq.s32.totalorder %s25, 0
      %p88 = por %p86, %p87
      %p89 = scmp.ne.s32.totalorder %s77, %s78
      %p90 = scmp.eq.s32.totalorder %s26, 1
      %p91 = por %p89, %p90
      %p93 = scmp.ne.s32.totalorder %s78, %s92
      %p94 = scmp.eq.s32.totalorder %s26, 0
      %p95 = por %p93, %p94
      %s97 = sadd.s32 %s96, 1
      %p100 = scmp.eq.s32.totalorder %s20, 1
      %p101 = scmp.ne.s32.totalorder %s96, %s98
      %p102 = scmp.eq.s32.totalorder %s20, 0
      %p103 = por %p101, %p102
      %p104 = scmp.ne.s32.totalorder %s96, %s98
      %p105 = scmp.eq.s32.totalorder %s25, 1
      %p106 = por %p104, %p105
      %p107 = scmp.ne.s32.totalorder %s98, %s99
      %p108 = scmp.eq.s32.totalorder %s25, 0
      %p109 = por %p107, %p108
      %p110 = scmp.ne.s32.totalorder %s98, %s99
      %p111 = scmp.eq.s32.totalorder %s26, 1
      %p112 = por %p110, %p111
      %p114 = scmp.ne.s32.totalorder %s99, %s113
      %p115 = scmp.eq.s32.totalorder %s26, 0
      %p116 = por %p114, %p115
      %s118 = sadd.s32 %s117, 1
      %p121 = scmp.eq.s32.totalorder %s20, 1
      %p122 = scmp.ne.s32.totalorder %s117, %s119
      %p123 = scmp.eq.s32.totalorder %s20, 0
      %p124 = por %p122, %p123
      %p125 = scmp.ne.s32.totalorder %s117, %s119
      %p126 = scmp.eq.s32.totalorder %s25, 1
      %p127 = por %p125, %p126
      %p128 = scmp.ne.s32.totalorder %s119, %s120
      %p129 = scmp.eq.s32.totalorder %s25, 0
      %p130 = por %p128, %p129
      %p131 = scmp.ne.s32.totalorder %s119, %s120
      %p132 = scmp.eq.s32.totalorder %s26, 1
      %p133 = por %p131, %p132
      %p135 = scmp.ne.s32.totalorder %s120, %s134
      %p136 = scmp.eq.s32.totalorder %s26, 0
      %p137 = por %p135, %p136
      %s139 = sadd.s32 %s138, 1
      %p142 = scmp.eq.s32.totalorder %s20, 1
      %p143 = scmp.ne.s32.totalorder %s138, %s140
      %p144 = scmp.eq.s32.totalorder %s20, 0
      %p145 = por %p143, %p144
      %p146 = scmp.ne.s32.totalorder %s138, %s140
      %p147 = scmp.eq.s32.totalorder %s25, 1
      %p148 = por %p146, %p147
      %p149 = scmp.ne.s32.totalorder %s140, %s141
      %p150 = scmp.eq.s32.totalorder %s25, 0
      %p151 = por %p149, %p150
      %p152 = scmp.ne.s32.totalorder %s140, %s141
      %p153 = scmp.eq.s32.totalorder %s26, 1
      %p154 = por %p152, %p153
      %p156 = scmp.ne.s32.totalorder %s141, %s155
      %p157 = scmp.eq.s32.totalorder %s26, 0
      %p158 = por %p156, %p157
      %s160 = sadd.s32 %s159, 1
      %p163 = scmp.eq.s32.totalorder %s20, 1
      %p164 = scmp.ne.s32.totalorder %s159, %s161
      %p165 = scmp.eq.s32.totalorder %s20, 0
      %p166 = por %p164, %p165
      %p167 = scmp.ne.s32.totalorder %s159, %s161
      %p168 = scmp.eq.s32.totalorder %s25, 1
      %p169 = por %p167, %p168
      %p170 = scmp.ne.s32.totalorder %s161, %s162
      %p171 = scmp.eq.s32.totalorder %s25, 0
      %p172 = por %p170, %p171
      %p173 = scmp.ne.s32.totalorder %s161, %s162
      %p174 = scmp.eq.s32.totalorder %s26, 1
      %p175 = por %p173, %p174
      %p177 = scmp.ne.s32.totalorder %s162, %s176
      %p178 = scmp.eq.s32.totalorder %s26, 0
      %p179 = por %p177, %p178
      %s181 = sadd.s32 %s180, 1
      %p184 = scmp.eq.s32.totalorder %s20, 1
      %p185 = scmp.ne.s32.totalorder %s180, %s182
      %p186 = scmp.eq.s32.totalorder %s20, 0
      %p187 = por %p185, %p186
      %p188 = scmp.ne.s32.totalorder %s180, %s182
      %p189 = scmp.eq.s32.totalorder %s25, 1
      %p190 = por %p188, %p189
      %p191 = scmp.ne.s32.totalorder %s182, %s183
      %p192 = scmp.eq.s32.totalorder %s25, 0
      %p193 = por %p191, %p192
      %p194 = scmp.ne.s32.totalorder %s182, %s183
      %p195 = scmp.eq.s32.totalorder %s26, 1
      %p196 = por %p194, %p195
      %p198 = scmp.ne.s32.totalorder %s183, %s197
      %p199 = scmp.eq.s32.totalorder %s26, 0
      %p200 = por %p198, %p199
      %s202 = sadd.s32 %s201, 1
      %p205 = scmp.eq.s32.totalorder %s20, 1
      %p206 = scmp.ne.s32.totalorder %s201, %s203
      %p207 = scmp.eq.s32.totalorder %s20, 0
      %p208 = por %p206, %p207
      %p209 = scmp.ne.s32.totalorder %s201, %s203
      %p210 = scmp.eq.s32.totalorder %s25, 1
      %p211 = por %p209, %p210
      %p212 = scmp.ne.s32.totalorder %s203, %s204
      %p213 = scmp.eq.s32.totalorder %s25, 0
      %p214 = por %p212, %p213
      %p215 = scmp.ne.s32.totalorder %s203, %s204
      %p216 = scmp.eq.s32.totalorder %s26, 1
      %p217 = por %p215, %p216
      %p219 = scmp.ne.s32.totalorder %s204, %s218
      %p220 = scmp.eq.s32.totalorder %s26, 0
      %p221 = por %p219, %p220
      %s223 = sadd.s32 %s222, 1
      %p226 = scmp.eq.s32.totalorder %s20, 1
      %p227 = scmp.ne.s32.totalorder %s222, %s224
      %p228 = scmp.eq.s32.totalorder %s20, 0
      %p229 = por %p227, %p228
      %p230 = scmp.ne.s32.totalorder %s222, %s224
      %p231 = scmp.eq.s32.totalorder %s25, 1
      %p232 = por %p230, %p231
      %p233 = scmp.ne.s32.totalorder %s224, %s225
      %p234 = scmp.eq.s32.totalorder %s25, 0
      %p235 = por %p233, %p234
      %p236 = scmp.ne.s32.totalorder %s224, %s225
      %p237 = scmp.eq.s32.totalorder %s26, 1
      %p238 = por %p236, %p237
      %p240 = scmp.ne.s32.totalorder %s225, %s239
      %p241 = scmp.eq.s32.totalorder %s26, 0
      %p242 = por %p240, %p241
      %s244 = sadd.s32 %s243, 1
      %p247 = scmp.eq.s32.totalorder %s20, 1
      %p248 = scmp.ne.s32.totalorder %s243, %s245
      %p249 = scmp.eq.s32.totalorder %s20, 0
      %p250 = por %p248, %p249
      %p251 = scmp.ne.s32.totalorder %s243, %s245
      %p252 = scmp.eq.s32.totalorder %s25, 1
      %p253 = por %p251, %p252
      %p254 = scmp.ne.s32.totalorder %s245, %s246
      %p255 = scmp.eq.s32.totalorder %s25, 0
      %p256 = por %p254, %p255
      %p257 = scmp.ne.s32.totalorder %s245, %s246
      %p258 = scmp.eq.s32.totalorder %s26, 1
      %p259 = por %p257, %p258
      %p261 = scmp.ne.s32.totalorder %s246, %s260
      %p262 = scmp.eq.s32.totalorder %s26, 0
      %p263 = por %p261, %p262
      %s264 = ssub.s32 %s20, %s27
      %p265 = scmp.eq.s32.totalorder %s264, 0
      %s267 = sadd.s32 %s266, 1
      %s268 = scalar_select %p265, %s266, %s267
      %p271 = pneg %p265
      %p272 = scmp.eq.s32.totalorder %s20, 1
      %p273 = por %p271, %p272
      %p274 = scmp.ne.s32.totalorder %s266, %s269
      %p275 = scmp.eq.s32.totalorder %s20, 0
      %p276 = por %p274, %p275
      %p277 = scmp.ne.s32.totalorder %s266, %s269
      %p278 = scmp.eq.s32.totalorder %s25, 1
      %p279 = por %p277, %p278
      %p280 = scmp.ne.s32.totalorder %s269, %s270
      %p281 = scmp.eq.s32.totalorder %s25, 0
      %p282 = por %p280, %p281
      %p283 = scmp.ne.s32.totalorder %s269, %s270
      %p284 = scmp.eq.s32.totalorder %s26, 1
      %p285 = por %p283, %p284
      %p287 = scmp.ne.s32.totalorder %s270, %s286
      %p288 = scmp.eq.s32.totalorder %s26, 0
      %p289 = por %p287, %p288
      %p290 = scmp.le.s32.totalorder 1, %s20
      %p291 = scmp.lt.s32.totalorder %s20, 3
      %p292 = pnand %p290, %p291
      %p293 = pneg %p292
      // Predicated region
      $region9: #{tpu_custom_call.1} parent=5 // pred_check
        _
      $region10: #{tpu_custom_call.1} parent=5 // pred_check_branch
        %295 = sbr.rel (%p292) target = $region12
      $region11: #{tpu_custom_call.1} parent=5 // pred_region
        %s296 = ssub.s32 %s20, 1
        // Predicated region
        $region13: #{tpu_custom_call.1} parent=11 // pred_check
          %p297 = pneg %p67
        $region14: #{tpu_custom_call.1} parent=11 // pred_check_branch
          %299 = sbr.rel (%p297) target = $region16
        $region15: #{tpu_custom_call.1} parent=11 // pred_region
          _
        $region16: #{tpu_custom_call.1} parent=11 // pred_fallthru
          _
        // Predicated region
        $region17: #{tpu_custom_call.1} parent=11 // pred_check
          %p300 = pneg %p88
        $region18: #{tpu_custom_call.1} parent=11 // pred_check_branch
          %302 = sbr.rel (%p300) target = $region20
        $region19: #{tpu_custom_call.1} parent=11 // pred_region
          _
        $region20: #{tpu_custom_call.1} parent=11 // pred_fallthru
          _
        // Predicated region
        $region21: #{tpu_custom_call.1} parent=11 // pred_check
          %p303 = pneg %p109
        $region22: #{tpu_custom_call.1} parent=11 // pred_check_branch
          %305 = sbr.rel (%p303) target = $region24
        $region23: #{tpu_custom_call.1} parent=11 // pred_region
          _
        $region24: #{tpu_custom_call.1} parent=11 // pred_fallthru
          _
        // Predicated region
        $region25: #{tpu_custom_call.1} parent=11 // pred_check
          %p306 = pneg %p130
        $region26: #{tpu_custom_call.1} parent=11 // pred_check_branch
          %308 = sbr.rel (%p306) target = $region28
        $region27: #{tpu_custom_call.1} parent=11 // pred_region
          _
        $region28: #{tpu_custom_call.1} parent=11 // pred_fallthru
          _
        // Predicated region
        $region29: #{tpu_custom_call.1} parent=11 // pred_check
          %p309 = pneg %p151
        $region30: #{tpu_custom_call.1} parent=11 // pred_check_branch
          %311 = sbr.rel (%p309) target = $region32
        $region31: #{tpu_custom_call.1} parent=11 // pred_region
          _
        $region32: #{tpu_custom_call.1} parent=11 // pred_fallthru
          _
        // Predicated region
        $region33: #{tpu_custom_call.1} parent=11 // pred_check
          %p312 = pneg %p172
        $region34: #{tpu_custom_call.1} parent=11 // pred_check_branch
          %314 = sbr.rel (%p312) target = $region36
        $region35: #{tpu_custom_call.1} parent=11 // pred_region
          _
        $region36: #{tpu_custom_call.1} parent=11 // pred_fallthru
          _
        // Predicated region
        $region37: #{tpu_custom_call.1} parent=11 // pred_check
          %p315 = pneg %p193
        $region38: #{tpu_custom_call.1} parent=11 // pred_check_branch
          %317 = sbr.rel (%p315) target = $region40
        $region39: #{tpu_custom_call.1} parent=11 // pred_region
          _
        $region40: #{tpu_custom_call.1} parent=11 // pred_fallthru
          _
        // Predicated region
        $region41: #{tpu_custom_call.1} parent=11 // pred_check
          %p318 = pneg %p214
        $region42: #{tpu_custom_call.1} parent=11 // pred_check_branch
          %320 = sbr.rel (%p318) target = $region44
        $region43: #{tpu_custom_call.1} parent=11 // pred_region
          _
        $region44: #{tpu_custom_call.1} parent=11 // pred_fallthru
          _
        // Predicated region
        $region45: #{tpu_custom_call.1} parent=11 // pred_check
          %p321 = pneg %p235
        $region46: #{tpu_custom_call.1} parent=11 // pred_check_branch
          %323 = sbr.rel (%p321) target = $region48
        $region47: #{tpu_custom_call.1} parent=11 // pred_region
          _
        $region48: #{tpu_custom_call.1} parent=11 // pred_fallthru
          _
        // Predicated region
        $region49: #{tpu_custom_call.1} parent=11 // pred_check
          %p324 = pneg %p256
        $region50: #{tpu_custom_call.1} parent=11 // pred_check_branch
          %326 = sbr.rel (%p324) target = $region52
        $region51: #{tpu_custom_call.1} parent=11 // pred_region
          _
        $region52: #{tpu_custom_call.1} parent=11 // pred_fallthru
          _
      $region12: #{tpu_custom_call.1} parent=5 // pred_fallthru
        _
      %p327 = scmp.lt.s32.totalorder %s20, 2
      // Predicated region
      $region53: #{tpu_custom_call.1} parent=5 // pred_check
        %p328 = pneg %p327
      $region54: #{tpu_custom_call.1} parent=5 // pred_check_branch
        %330 = sbr.rel (%p328) target = $region56
      $region55: #{tpu_custom_call.1} parent=5 // pred_region
        // Predicated region
        $region57: #{tpu_custom_call.1} parent=55 // pred_check
          %p331 = pneg %p40
        $region58: #{tpu_custom_call.1} parent=55 // pred_check_branch
          %333 = sbr.rel (%p331) target = $region60
        $region59: #{tpu_custom_call.1} parent=55 // pred_region
          %p334 = scmp.lt.s32.totalorder %s20, 1
          %s335 = scalar_select %p334, %s20, 1
          %s336 = smul.addr %s335, 4
          %s337 = scalar_lea.vmem %s0, %s336
        $region60: #{tpu_custom_call.1} parent=55 // pred_fallthru
          _
      $region56: #{tpu_custom_call.1} parent=5 // pred_fallthru
        _
      %p338 = scmp.le.s32.totalorder 1, %s20
      %p339 = scmp.lt.s32.totalorder %s20, 3
      %p340 = pnand %p338, %p339
      %p341 = pneg %p340
      // Predicated region
      $region61: #{tpu_custom_call.1} parent=5 // pred_check
        _
      $region62: #{tpu_custom_call.1} parent=5 // pred_check_branch
        %343 = sbr.rel (%p340) target = $region64
      $region63: #{tpu_custom_call.1} parent=5 // pred_region
        %s344 = ssub.s32 %s20, 1
        %p345 = scmp.lt.s32.totalorder %s25, 1
        %s346 = scalar_select %p345, %s25, 1
        %s347 = smul.addr %s346, 4
        %s348 = scalar_lea.vmem %s0, %s347
        %p349 = pneg %p46
        %p350 = pneg %p43
        %p351 = pneg %p67
        %p352 = pneg %p64
        %p353 = pneg %p88
        %p354 = pneg %p85
        %p355 = pneg %p109
        %p356 = pneg %p106
        %p357 = pneg %p130
        %p358 = pneg %p127
        %p359 = pneg %p151
        %p360 = pneg %p148
        %p361 = pneg %p172
        %p362 = pneg %p169
        %p363 = pneg %p193
        %p364 = pneg %p190
        %p365 = pneg %p214
        %p366 = pneg %p211
        %p367 = pneg %p235
        %p368 = pneg %p232
        %p369 = pneg %p256
        %p370 = pneg %p253
        %p371 = pneg %p282
        %p372 = pneg %p279
        %s373 = sand.u32 %s269, 1
        %s374 = scalar_lea.sflag [#allocation3], %s373
        %s375 = sand.u32 %s269, 1
        %s376 = smul.addr %s375, 4
        %s377 = scalar_lea.vmem [#allocation2], %s376
        %p378 = scmp.lt.s32.totalorder %s25, 1
        %s379 = scalar_select %p378, %s25, 1
        %s380 = smul.addr %s379, 4
        %s381 = scalar_lea.vmem %s0, %s380
        %v383 = vld [vmem:[%s381] sm:$0xf]
        %v384 = vunpack.c.l.bf16 %v383
        %v385 = vld [vmem:[%s1] sm:$0x1]
        %v386 = vld [vmem:[%s2] sm:$0x1]
        %vm387 = vcmask 261120
        %v388 = vsel %vm387, %v384, 0.0
        %389 = vadd.xlane.f32.xlu0 %v388
        %v390 = vpop.xlane.xlu0 %389
        %v391 = vrcp.pop 32.0
        %v392 = vmul.f32 %v390, %v391
        %v393 = vsub.f32 %v384, %v392
        %v394 = vmul.f32 %v393, %v393
        %v395 = vsel %vm387, %v394, 0.0
        %396 = vadd.xlane.f32.xlu0 %v395
        %v397 = vpop.xlane.xlu0 %396
        %v398 = vmul.f32 %v397, %v391
        %v399 = vadd.f32 %v398, 1e-05
        %v400 = vrsqrt.pop %v399
        %v401 = vmul.f32 %v393, %v400
        %v403 = vlaneseq
        %v404 = vshrl.u32 %v403, 7
        %v405 = vsub.s32 0, %v404
        %v406 = vrot.slane %v385, %v405
        %v408 = vmul.f32 %v401, %v406
        %v410 = vlaneseq
        %v411 = vshrl.u32 %v410, 7
        %v412 = vsub.s32 0, %v411
        %v413 = vrot.slane %v386, %v412
        %v415 = vadd.f32 %v408, %v413
        %417 = vrot.lane.b32.xlu0 %v415, 112
        %v418 = vpop.permute.xlu0 %417
        %v420 = vcombine.high %v415, 0.0
        %v422 = vunpack.c.l.s4 1983009808
        %v423 = vunpack.c.0.s8 %v422
        %v424 = vlaneseq
        %v425 = vshrl.u32 %v424, 7
        %v426 = vsub.s32 %v423, %v425
        %v427 = vrot.slane %v415, %v426
        %v429 = vunpack.c.l.s4 1983009808
        %v430 = vunpack.c.0.s8 %v429
        %v431 = vlaneseq
        %v432 = vshrl.u32 %v431, 7
        %v433 = vsub.s32 %v430, %v432
        %v434 = vrot.slane %v420, %v433
        %v435 = vcombine.high %v418, 0.0
        %v437 = vunpack.c.l.s4 1983009808
        %v438 = vunpack.c.0.s8 %v437
        %v439 = vlaneseq
        %v440 = vshrl.u32 %v439, 7
        %v441 = vsub.s32 %v438, %v440
        %v442 = vrot.slane %v418, %v441
        %v444 = vunpack.c.l.s4 1983009808
        %v445 = vunpack.c.0.s8 %v444
        %v446 = vlaneseq
        %v447 = vshrl.u32 %v446, 7
        %v448 = vsub.s32 %v445, %v447
        %v449 = vrot.slane %v435, %v448
        %v450 = vcombine.low %v427, %v442
        %v451 = vcombine.high %v427, %v442
        %v453 = vunpack.c.l.s4 1934713408
        %v454 = vunpack.c.0.s8 %v453
        %v455 = vlaneseq
        %v456 = vshrl.u32 %v455, 7
        %v457 = vsub.s32 %v454, %v456
        %v458 = vrot.slane %v450, %v457
        %v460 = vunpack.c.l.s4 1934713408
        %v461 = vunpack.c.0.s8 %v460
        %v462 = vlaneseq
        %v463 = vshrl.u32 %v462, 7
        %v464 = vsub.s32 %v461, %v463
        %v465 = vrot.slane %v451, %v464
        %v466 = vcombine.low %v434, %v449
        %v467 = vcombine.high %v434, %v449
        %v469 = vunpack.c.l.s4 1934713408
        %v470 = vunpack.c.0.s8 %v469
        %v471 = vlaneseq
        %v472 = vshrl.u32 %v471, 7
        %v473 = vsub.s32 %v470, %v472
        %v474 = vrot.slane %v466, %v473
        %v476 = vunpack.c.l.s4 1934713408
        %v477 = vunpack.c.0.s8 %v476
        %v478 = vlaneseq
        %v479 = vshrl.u32 %v478, 7
        %v480 = vsub.s32 %v477, %v479
        %v481 = vrot.slane %v467, %v480
        %v482 = vcombine.high %v458, 0.0
        %v483 = vcombine.high %v465, 0.0
        %v484 = vcombine.high %v474, 0.0
        %v485 = vcombine.high %v481, 0.0
        %v486 = vcombine.low %v458, %v465
        %v488 = vunpack.c.l.s4 1983009808
        %v489 = vunpack.c.0.s8 %v488
        %v490 = vlaneseq
        %v491 = vshrl.u32 %v490, 7
        %v492 = vsub.s32 %v489, %v491
        %v493 = vrot.slane %v486, %v492
        %v494 = vcombine.low %v482, %v483
        %v496 = vunpack.c.l.s4 1983009808
        %v497 = vunpack.c.0.s8 %v496
        %v498 = vlaneseq
        %v499 = vshrl.u32 %v498, 7
        %v500 = vsub.s32 %v497, %v499
        %v501 = vrot.slane %v494, %v500
        %v502 = vcombine.low %v474, %v481
        %v504 = vunpack.c.l.s4 1983009808
        %v505 = vunpack.c.0.s8 %v504
        %v506 = vlaneseq
        %v507 = vshrl.u32 %v506, 7
        %v508 = vsub.s32 %v505, %v507
        %v509 = vrot.slane %v502, %v508
        %v510 = vcombine.low %v484, %v485
        %v512 = vunpack.c.l.s4 1983009808
        %v513 = vunpack.c.0.s8 %v512
        %v514 = vlaneseq
        %v515 = vshrl.u32 %v514, 7
        %v516 = vsub.s32 %v513, %v515
        %v517 = vrot.slane %v510, %v516
        %v518 = vcombine.low %v493, %v501
        %v520 = vunpack.c.l.s4 1934713408
        %v521 = vunpack.c.0.s8 %v520
        %v522 = vlaneseq
        %v523 = vshrl.u32 %v522, 7
        %v524 = vsub.s32 %v521, %v523
        %v525 = vrot.slane %v518, %v524
        %v526 = vcombine.low %v509, %v517
        %v528 = vunpack.c.l.s4 1934713408
        %v529 = vunpack.c.0.s8 %v528
        %v530 = vlaneseq
        %v531 = vshrl.u32 %v530, 7
        %v532 = vsub.s32 %v529, %v531
        %v533 = vrot.slane %v526, %v532
        %v534 = vcombine.low %v525, %v533
        %v535 = vcombine.high %v525, %v533
        %v536 = vpack.c.bf16 %v534, %v534
        %v537 = vpack.c.bf16 %v535, %v535
        %v538 = vld [vmem:[%s3] sm:$0xf]
        %v539 = vld [vmem:[%s3 + $0x4] sm:$0xf]
        %v540 = vld [vmem:[%s3 + $0x8] sm:$0xf]
        %v541 = vld [vmem:[%s3 + $0xc] sm:$0xf]
        %v542 = vld [vmem:[%s4] sm:$0x1]
        %v543 = vld [vmem:[%s4 + $0x1] sm:$0x1]
        %v546 = vlaneseq
        %v547 = vshrl.u32 %v546, 7
        %v548 = vsub.s32 0, %v547
        %v549 = vrot.slane %v542, %v548
        %v550 = vlaneseq
        %v551 = vshrl.u32 %v550, 7
        %v552 = vsub.s32 0, %v551
        %v553 = vrot.slane %v543, %v552
        %v558 = vunpack.c.l.b16 %v538
        %v559 = vunpack.c.l.b16 %v539
        %v560 = vpack.c.b16 %v559, %v558
        %vm562 = vcmask 130048
        %v564 = vsel %vm562, %v536, 0
        %566 = vmatprep.subr.bf16.mxu0 0
        %567 = vmatpush1.bf16.msra.mxu0 0
        %568 = vmatprep.subr.bf16.mxu0 0
        %569 = vmatpush1.bf16.msra.mxu0 0
        %570 = vmatprep.subr.bf16.mxu0 0
        %571 = vmatpush1.bf16.msra.mxu0 0
        %572 = vmatprep.subr.bf16.mxu0 0
        %573 = vmatpush1.bf16.msra.mxu0 0
        %574 = vmatprep.subr.bf16.mxu0 0
        %575 = vmatpush1.bf16.msra.mxu0 0
        %576 = vmatprep.subr.bf16.mxu0 0
        %577 = vmatpush1.bf16.msra.mxu0 0
        %578 = vmatprep.subr.bf16.mxu0 0
        %579 = vmatpush1.bf16.msra.mxu0 0
        %580 = vmatprep.subr.bf16.mxu0 0
        %581 = vmatpush1.bf16.msra.mxu0 %v560
        %582 = vmatprep.subr.bf16.mxu0 0
        %583 = vmatpush2.bf16.msra.mxu0 0
        %584 = vmatprep.subr.bf16.mxu0 0
        %585 = vmatpush2.bf16.msra.mxu0 0
        %586 = vmatprep.subr.bf16.mxu0 0
        %587 = vmatpush2.bf16.msra.mxu0 0
        %588 = vmatprep.subr.bf16.mxu0 0
        %589 = vmatpush2.bf16.msra.mxu0 0
        %590 = vmatprep.subr.bf16.mxu0 0
        %591 = vmatpush2.bf16.msra.mxu0 0
        %592 = vmatprep.subr.bf16.mxu0 0
        %593 = vmatpush2.bf16.msra.mxu0 0
        %594 = vmatprep.subr.bf16.mxu0 0
        %595 = vmatpush2.bf16.msra.mxu0 0
        %596 = vmatprep.subr.bf16.mxu0 0
        %597 = vmatpush2.bf16.msra.mxu0 0
        %598 = vmatprep.mubr.bf16.mxu0 0
        %599 = vmatmul.mubr.bf16.gmra.mxu0 %v564
        %v600 = vpop.f32.mrf.mxu0
        %v601 = vadd.f32 %v549, %v600
        %v602 = vpop.f32.mrf.mxu0
        %v603 = vpop.f32.mrf.mxu0
        %v604 = vpop.f32.mrf.mxu0
        %605 = vdwg.mxu0
        %v608 = vunpack.c.l.b16 %v540
        %v609 = vunpack.c.l.b16 %v541
        %v610 = vpack.c.b16 %v609, %v608
        %v613 = vsel %vm562, %v537, 0
        %615 = vmatprep.subr.bf16.mxu0 0
        %616 = vmatpush1.bf16.msra.mxu0 0
        %617 = vmatprep.subr.bf16.mxu0 0
        %618 = vmatpush1.bf16.msra.mxu0 0
        %619 = vmatprep.subr.bf16.mxu0 0
        %620 = vmatpush1.bf16.msra.mxu0 0
        %621 = vmatprep.subr.bf16.mxu0 0
        %622 = vmatpush1.bf16.msra.mxu0 0
        %623 = vmatprep.subr.bf16.mxu0 0
        %624 = vmatpush1.bf16.msra.mxu0 0
        %625 = vmatprep.subr.bf16.mxu0 0
        %626 = vmatpush1.bf16.msra.mxu0 0
        %627 = vmatprep.subr.bf16.mxu0 0
        %628 = vmatpush1.bf16.msra.mxu0 0
        %629 = vmatprep.subr.bf16.mxu0 0
        %630 = vmatpush1.bf16.msra.mxu0 %v610
        %631 = vmatprep.subr.bf16.mxu0 0
        %632 = vmatpush2.bf16.msra.mxu0 0
        %633 = vmatprep.subr.bf16.mxu0 0
        %634 = vmatpush2.bf16.msra.mxu0 0
        %635 = vmatprep.subr.bf16.mxu0 0
        %636 = vmatpush2.bf16.msra.mxu0 0
        %637 = vmatprep.subr.bf16.mxu0 0
        %638 = vmatpush2.bf16.msra.mxu0 0
        %639 = vmatprep.subr.bf16.mxu0 0
        %640 = vmatpush2.bf16.msra.mxu0 0
        %641 = vmatprep.subr.bf16.mxu0 0
        %642 = vmatpush2.bf16.msra.mxu0 0
        %643 = vmatprep.subr.bf16.mxu0 0
        %644 = vmatpush2.bf16.msra.mxu0 0
        %645 = vmatprep.subr.bf16.mxu0 0
        %646 = vmatpush2.bf16.msra.mxu0 0
        %647 = vmatprep.mubr.bf16.mxu0 0
        %648 = vmatmul.mubr.bf16.gmra.mxu0 %v613
        %v649 = vpop.f32.mrf.mxu0
        %v650 = vadd.f32 %v553, %v649
        %v651 = vpop.f32.mrf.mxu0
        %v652 = vpop.f32.mrf.mxu0
        %v653 = vpop.f32.mrf.mxu0
        %654 = vdwg.mxu0
        %v655 = vmul.f32 %v601, 0.25
        %v656 = vmul.f32 %v650, 0.25
        %v657 = vpack.c.bf16 %v655, %v655
        %v658 = vpack.c.bf16 %v656, %v656
        %v659 = vpack.c.bf16 %v601, %v601
        %v660 = vpack.c.bf16 %v650, %v650
        %662 = vrot.lane.b32.xlu0 %v659, 112
        %v663 = vpop.permute.xlu0 %662
        %v665 = vsel %vm562, %v657, 0
        %v668 = vsel %vm562, %v663, 0
        %670 = vmatprep.subr.bf16.mxu0 0
        %671 = vmatpush1.bf16.xpose.msra.mxu0 0
        %672 = vmatprep.subr.bf16.mxu0 0
        %673 = vmatpush1.bf16.xpose.msra.mxu0 0
        %674 = vmatprep.subr.bf16.mxu0 0
        %675 = vmatpush1.bf16.xpose.msra.mxu0 0
        %676 = vmatprep.subr.bf16.mxu0 0
        %677 = vmatpush1.bf16.xpose.msra.mxu0 0
        %678 = vmatprep.subr.bf16.mxu0 0
        %679 = vmatpush1.bf16.xpose.msra.mxu0 0
        %680 = vmatprep.subr.bf16.mxu0 0
        %681 = vmatpush1.bf16.xpose.msra.mxu0 0
        %682 = vmatprep.subr.bf16.mxu0 0
        %683 = vmatpush1.bf16.xpose.msra.mxu0 0
        %684 = vmatprep.subr.bf16.mxu0 0
        %685 = vmatpush1.bf16.xpose.msra.mxu0 %v668
        %686 = vmatprep.subr.bf16.mxu0 0
        %687 = vmatpush2.bf16.xpose.msra.mxu0 0
        %688 = vmatprep.subr.bf16.mxu0 0
        %689 = vmatpush2.bf16.xpose.msra.mxu0 0
        %690 = vmatprep.subr.bf16.mxu0 0
        %691 = vmatpush2.bf16.xpose.msra.mxu0 0
        %692 = vmatprep.subr.bf16.mxu0 0
        %693 = vmatpush2.bf16.xpose.msra.mxu0 0
        %694 = vmatprep.subr.bf16.mxu0 0
        %695 = vmatpush2.bf16.xpose.msra.mxu0 0
        %696 = vmatprep.subr.bf16.mxu0 0
        %697 = vmatpush2.bf16.xpose.msra.mxu0 0
        %698 = vmatprep.subr.bf16.mxu0 0
        %699 = vmatpush2.bf16.xpose.msra.mxu0 0
        %700 = vmatprep.subr.bf16.mxu0 0
        %701 = vmatpush2.bf16.xpose.msra.mxu0 0
        %702 = vmatprep.mubr.bf16.mxu0 0
        %703 = vmatmul.mubr.bf16.gmra.mxu0 %v665
        %v704 = vpop.f32.mrf.mxu0
        %v705 = vadd.f32 0.0, %v704
        %v706 = vpop.f32.mrf.mxu0
        %v707 = vpop.f32.mrf.mxu0
        %v708 = vpop.f32.mrf.mxu0
        %709 = vdwg.mxu0
        %711 = vrot.lane.b32.xlu0 %v660, 112
        %v712 = vpop.permute.xlu0 %711
        %v714 = vsel %vm562, %v658, 0
        %v717 = vsel %vm562, %v712, 0
        %719 = vmatprep.subr.bf16.mxu0 0
        %720 = vmatpush1.bf16.xpose.msra.mxu0 0
        %721 = vmatprep.subr.bf16.mxu0 0
        %722 = vmatpush1.bf16.xpose.msra.mxu0 0
        %723 = vmatprep.subr.bf16.mxu0 0
        %724 = vmatpush1.bf16.xpose.msra.mxu0 0
        %725 = vmatprep.subr.bf16.mxu0 0
        %726 = vmatpush1.bf16.xpose.msra.mxu0 0
        %727 = vmatprep.subr.bf16.mxu0 0
        %728 = vmatpush1.bf16.xpose.msra.mxu0 0
        %729 = vmatprep.subr.bf16.mxu0 0
        %730 = vmatpush1.bf16.xpose.msra.mxu0 0
        %731 = vmatprep.subr.bf16.mxu0 0
        %732 = vmatpush1.bf16.xpose.msra.mxu0 0
        %733 = vmatprep.subr.bf16.mxu0 0
        %734 = vmatpush1.bf16.xpose.msra.mxu0 %v717
        %735 = vmatprep.subr.bf16.mxu0 0
        %736 = vmatpush2.bf16.xpose.msra.mxu0 0
        %737 = vmatprep.subr.bf16.mxu0 0
        %738 = vmatpush2.bf16.xpose.msra.mxu0 0
        %739 = vmatprep.subr.bf16.mxu0 0
        %740 = vmatpush2.bf16.xpose.msra.mxu0 0
        %741 = vmatprep.subr.bf16.mxu0 0
        %742 = vmatpush2.bf16.xpose.msra.mxu0 0
        %743 = vmatprep.subr.bf16.mxu0 0
        %744 = vmatpush2.bf16.xpose.msra.mxu0 0
        %745 = vmatprep.subr.bf16.mxu0 0
        %746 = vmatpush2.bf16.xpose.msra.mxu0 0
        %747 = vmatprep.subr.bf16.mxu0 0
        %748 = vmatpush2.bf16.xpose.msra.mxu0 0
        %749 = vmatprep.subr.bf16.mxu0 0
        %750 = vmatpush2.bf16.xpose.msra.mxu0 0
        %751 = vmatprep.mubr.bf16.mxu0 0
        %752 = vmatmul.mubr.bf16.gmra.mxu0 %v714
        %v753 = vpop.f32.mrf.mxu0
        %v754 = vadd.f32 0.0, %v753
        %v755 = vpop.f32.mrf.mxu0
        %v756 = vpop.f32.mrf.mxu0
        %v757 = vpop.f32.mrf.mxu0
        %758 = vdwg.mxu0
        %vm759 = vcmask 64512
        %v760 = vsel %vm759, %v705, -inf
        %761 = vmax.xlane.f32.xlu0 %v760
        %v762 = vpop.xlane.xlu0 %761
        %v763 = vsel %vm759, %v754, -inf
        %764 = vmax.xlane.f32.xlu0 %v763
        %v765 = vpop.xlane.xlu0 %764
        %v766 = vsub.f32 %v705, %v762
        %v767 = vsub.f32 %v754, %v765
        %v768 = vmul.f32 %v766, 1.442695
        %v769 = vpow.pop %v768
        %v770 = vmul.f32 %v767, 1.442695
        %v771 = vpow.pop %v770
        %v772 = vsel %vm759, %v769, 0.0
        %773 = vadd.xlane.f32.xlu0 %v772
        %v774 = vpop.xlane.xlu0 %773
        %v775 = vsel %vm759, %v771, 0.0
        %776 = vadd.xlane.f32.xlu0 %v775
        %v777 = vpop.xlane.xlu0 %776
        %v778 = vpack.c.bf16 %v769, %v769
        %v779 = vpack.c.bf16 %v771, %v771
        %780 = vrot.lane.b32.xlu0 %v659, 96
        %v781 = vpop.permute.xlu0 %780
        %v783 = vsel %vm759, %v778, 0
        %vm785 = vcmask 1043456
        %v787 = vsel %vm785, %v781, 0
        %789 = vmatprep.subr.bf16.mxu0 0
        %790 = vmatpush1.bf16.msra.mxu0 0
        %791 = vmatprep.subr.bf16.mxu0 0
        %792 = vmatpush1.bf16.msra.mxu0 0
        %793 = vmatprep.subr.bf16.mxu0 0
        %794 = vmatpush1.bf16.msra.mxu0 0
        %795 = vmatprep.subr.bf16.mxu0 0
        %796 = vmatpush1.bf16.msra.mxu0 0
        %797 = vmatprep.subr.bf16.mxu0 0
        %798 = vmatpush1.bf16.msra.mxu0 0
        %799 = vmatprep.subr.bf16.mxu0 0
        %800 = vmatpush1.bf16.msra.mxu0 0
        %801 = vmatprep.subr.bf16.mxu0 0
        %802 = vmatpush1.bf16.msra.mxu0 0
        %803 = vmatprep.subr.bf16.mxu0 0
        %804 = vmatpush1.bf16.msra.mxu0 %v787
        %805 = vmatprep.subr.bf16.mxu0 0
        %806 = vmatpush2.bf16.msra.mxu0 0
        %807 = vmatprep.subr.bf16.mxu0 0
        %808 = vmatpush2.bf16.msra.mxu0 0
        %809 = vmatprep.subr.bf16.mxu0 0
        %810 = vmatpush2.bf16.msra.mxu0 0
        %811 = vmatprep.subr.bf16.mxu0 0
        %812 = vmatpush2.bf16.msra.mxu0 0
        %813 = vmatprep.subr.bf16.mxu0 0
        %814 = vmatpush2.bf16.msra.mxu0 0
        %815 = vmatprep.subr.bf16.mxu0 0
        %816 = vmatpush2.bf16.msra.mxu0 0
        %817 = vmatprep.subr.bf16.mxu0 0
        %818 = vmatpush2.bf16.msra.mxu0 0
        %819 = vmatprep.subr.bf16.mxu0 0
        %820 = vmatpush2.bf16.msra.mxu0 0
        %821 = vmatprep.mubr.bf16.mxu0 0
        %822 = vmatmul.mubr.bf16.gmra.mxu0 %v783
        %v823 = vpop.f32.mrf.mxu0
        %v824 = vadd.f32 0.0, %v823
        %v825 = vpop.f32.mrf.mxu0
        %v826 = vpop.f32.mrf.mxu0
        %v827 = vpop.f32.mrf.mxu0
        %828 = vdwg.mxu0
        %829 = vrot.lane.b32.xlu0 %v660, 96
        %v830 = vpop.permute.xlu0 %829
        %v832 = vsel %vm759, %v779, 0
        %v835 = vsel %vm785, %v830, 0
        %837 = vmatprep.subr.bf16.mxu0 0
        %838 = vmatpush1.bf16.msra.mxu0 0
        %839 = vmatprep.subr.bf16.mxu0 0
        %840 = vmatpush1.bf16.msra.mxu0 0
        %841 = vmatprep.subr.bf16.mxu0 0
        %842 = vmatpush1.bf16.msra.mxu0 0
        %843 = vmatprep.subr.bf16.mxu0 0
        %844 = vmatpush1.bf16.msra.mxu0 0
        %845 = vmatprep.subr.bf16.mxu0 0
        %846 = vmatpush1.bf16.msra.mxu0 0
        %847 = vmatprep.subr.bf16.mxu0 0
        %848 = vmatpush1.bf16.msra.mxu0 0
        %849 = vmatprep.subr.bf16.mxu0 0
        %850 = vmatpush1.bf16.msra.mxu0 0
        %851 = vmatprep.subr.bf16.mxu0 0
        %852 = vmatpush1.bf16.msra.mxu0 %v835
        %853 = vmatprep.subr.bf16.mxu0 0
        %854 = vmatpush2.bf16.msra.mxu0 0
        %855 = vmatprep.subr.bf16.mxu0 0
        %856 = vmatpush2.bf16.msra.mxu0 0
        %857 = vmatprep.subr.bf16.mxu0 0
        %858 = vmatpush2.bf16.msra.mxu0 0
        %859 = vmatprep.subr.bf16.mxu0 0
        %860 = vmatpush2.bf16.msra.mxu0 0
        %861 = vmatprep.subr.bf16.mxu0 0
        %862 = vmatpush2.bf16.msra.mxu0 0
        %863 = vmatprep.subr.bf16.mxu0 0
        %864 = vmatpush2.bf16.msra.mxu0 0
        %865 = vmatprep.subr.bf16.mxu0 0
        %866 = vmatpush2.bf16.msra.mxu0 0
        %867 = vmatprep.subr.bf16.mxu0 0
        %868 = vmatpush2.bf16.msra.mxu0 0
        %869 = vmatprep.mubr.bf16.mxu0 0
        %870 = vmatmul.mubr.bf16.gmra.mxu0 %v832
        %v871 = vpop.f32.mrf.mxu0
        %v872 = vadd.f32 0.0, %v871
        %v873 = vpop.f32.mrf.mxu0
        %v874 = vpop.f32.mrf.mxu0
        %v875 = vpop.f32.mrf.mxu0
        %876 = vdwg.mxu0
        %v877 = vrcp.pop %v774
        %v878 = vrcp.pop %v777
        %v879 = vmul.f32 %v824, %v877
        %v880 = vmul.f32 %v872, %v878
        %v881 = vcombine.high %v879, 0.0
        %v883 = vunpack.c.l.s4 1983009808
        %v884 = vunpack.c.0.s8 %v883
        %v885 = vlaneseq
        %v886 = vshrl.u32 %v885, 7
        %v887 = vsub.s32 %v884, %v886
        %v888 = vrot.slane %v879, %v887
        %v890 = vunpack.c.l.s4 1983009808
        %v891 = vunpack.c.0.s8 %v890
        %v892 = vlaneseq
        %v893 = vshrl.u32 %v892, 7
        %v894 = vsub.s32 %v891, %v893
        %v895 = vrot.slane %v881, %v894
        %v896 = vcombine.high %v880, 0.0
        %v898 = vunpack.c.l.s4 1983009808
        %v899 = vunpack.c.0.s8 %v898
        %v900 = vlaneseq
        %v901 = vshrl.u32 %v900, 7
        %v902 = vsub.s32 %v899, %v901
        %v903 = vrot.slane %v880, %v902
        %v905 = vunpack.c.l.s4 1983009808
        %v906 = vunpack.c.0.s8 %v905
        %v907 = vlaneseq
        %v908 = vshrl.u32 %v907, 7
        %v909 = vsub.s32 %v906, %v908
        %v910 = vrot.slane %v896, %v909
        %v911 = vcombine.low %v888, %v903
        %v912 = vcombine.high %v888, %v903
        %v914 = vunpack.c.l.s4 1934713408
        %v915 = vunpack.c.0.s8 %v914
        %v916 = vlaneseq
        %v917 = vshrl.u32 %v916, 7
        %v918 = vsub.s32 %v915, %v917
        %v919 = vrot.slane %v911, %v918
        %v921 = vunpack.c.l.s4 1934713408
        %v922 = vunpack.c.0.s8 %v921
        %v923 = vlaneseq
        %v924 = vshrl.u32 %v923, 7
        %v925 = vsub.s32 %v922, %v924
        %v926 = vrot.slane %v912, %v925
        %v927 = vcombine.low %v895, %v910
        %v928 = vcombine.high %v895, %v910
        %v930 = vunpack.c.l.s4 1934713408
        %v931 = vunpack.c.0.s8 %v930
        %v932 = vlaneseq
        %v933 = vshrl.u32 %v932, 7
        %v934 = vsub.s32 %v931, %v933
        %v935 = vrot.slane %v927, %v934
        %v937 = vunpack.c.l.s4 1934713408
        %v938 = vunpack.c.0.s8 %v937
        %v939 = vlaneseq
        %v940 = vshrl.u32 %v939, 7
        %v941 = vsub.s32 %v938, %v940
        %v942 = vrot.slane %v928, %v941
        %v943 = vcombine.high %v919, 0.0
        %v944 = vcombine.high %v926, 0.0
        %v945 = vcombine.high %v935, 0.0
        %v946 = vcombine.high %v942, 0.0
        %v947 = vcombine.low %v919, %v926
        %v949 = vunpack.c.l.s4 1983009808
        %v950 = vunpack.c.0.s8 %v949
        %v951 = vlaneseq
        %v952 = vshrl.u32 %v951, 7
        %v953 = vsub.s32 %v950, %v952
        %v954 = vrot.slane %v947, %v953
        %v955 = vcombine.low %v943, %v944
        %v957 = vunpack.c.l.s4 1983009808
        %v958 = vunpack.c.0.s8 %v957
        %v959 = vlaneseq
        %v960 = vshrl.u32 %v959, 7
        %v961 = vsub.s32 %v958, %v960
        %v962 = vrot.slane %v955, %v961
        %v963 = vcombine.low %v935, %v942
        %v965 = vunpack.c.l.s4 1983009808
        %v966 = vunpack.c.0.s8 %v965
        %v967 = vlaneseq
        %v968 = vshrl.u32 %v967, 7
        %v969 = vsub.s32 %v966, %v968
        %v970 = vrot.slane %v963, %v969
        %v971 = vcombine.low %v945, %v946
        %v973 = vunpack.c.l.s4 1983009808
        %v974 = vunpack.c.0.s8 %v973
        %v975 = vlaneseq
        %v976 = vshrl.u32 %v975, 7
        %v977 = vsub.s32 %v974, %v976
        %v978 = vrot.slane %v971, %v977
        %v979 = vcombine.low %v954, %v962
        %v981 = vunpack.c.l.s4 1934713408
        %v982 = vunpack.c.0.s8 %v981
        %v983 = vlaneseq
        %v984 = vshrl.u32 %v983, 7
        %v985 = vsub.s32 %v982, %v984
        %v986 = vrot.slane %v979, %v985
        %v987 = vcombine.low %v970, %v978
        %v989 = vunpack.c.l.s4 1934713408
        %v990 = vunpack.c.0.s8 %v989
        %v991 = vlaneseq
        %v992 = vshrl.u32 %v991, 7
        %v993 = vsub.s32 %v990, %v992
        %v994 = vrot.slane %v987, %v993
        %v995 = vcombine.low %v986, %v994
        %v996 = vcombine.high %v986, %v994
        %998 = vrot.lane.b32.xlu0 %v996, 16
        %v999 = vpop.permute.xlu0 %998
        %v1001 = vsel %vm562, %v995, %v999
        %v1002 = vadd.f32 %v384, %v1001
        %v1003 = vld [vmem:[%s5] sm:$0x1]
        %v1004 = vld [vmem:[%s6] sm:$0x1]
        %v1005 = vsel %vm387, %v1002, 0.0
        %1006 = vadd.xlane.f32.xlu0 %v1005
        %v1007 = vpop.xlane.xlu0 %1006
        %v1008 = vmul.f32 %v1007, %v391
        %v1009 = vsub.f32 %v1002, %v1008
        %v1010 = vmul.f32 %v1009, %v1009
        %v1011 = vsel %vm387, %v1010, 0.0
        %1012 = vadd.xlane.f32.xlu0 %v1011
        %v1013 = vpop.xlane.xlu0 %1012
        %v1014 = vmul.f32 %v1013, %v391
        %v1015 = vadd.f32 %v1014, 1e-05
        %v1016 = vrsqrt.pop %v1015
        %v1017 = vmul.f32 %v1009, %v1016
        %v1019 = vlaneseq
        %v1020 = vshrl.u32 %v1019, 7
        %v1021 = vsub.s32 0, %v1020
        %v1022 = vrot.slane %v1003, %v1021
        %v1024 = vmul.f32 %v1017, %v1022
        %v1026 = vlaneseq
        %v1027 = vshrl.u32 %v1026, 7
        %v1028 = vsub.s32 0, %v1027
        %v1029 = vrot.slane %v1004, %v1028
        %v1031 = vadd.f32 %v1024, %v1029
        %v1032 = vpack.c.bf16 %v1031, %v1031
        %v1033 = vld [vmem:[%s7] sm:$0xf]
        %v1034 = vld [vmem:[%s7 + $0x4] sm:$0xf]
        %v1035 = vld [vmem:[%s7 + $0x8] sm:$0xf]
        %v1036 = vld [vmem:[%s7 + $0xc] sm:$0xf]
        %v1037 = vld [vmem:[%s8] sm:$0x1]
        %v1039 = vlaneseq
        %v1040 = vshrl.u32 %v1039, 7
        %v1041 = vsub.s32 0, %v1040
        %v1042 = vrot.slane %v1037, %v1041
        %v1048 = vunpack.c.l.b16 %v1033
        %v1049 = vunpack.c.l.b16 %v1034
        %v1050 = vunpack.c.l.b16 %v1035
        %v1051 = vunpack.c.l.b16 %v1036
        %v1052 = vpack.c.b16 %v1049, %v1048
        %v1053 = vpack.c.b16 %v1051, %v1050
        %v1057 = vsel %vm387, %v1032, 0
        %1059 = vmatprep.subr.bf16.mxu0 0
        %1060 = vmatpush1.bf16.msra.mxu0 0
        %1061 = vmatprep.subr.bf16.mxu0 0
        %1062 = vmatpush1.bf16.msra.mxu0 0
        %1063 = vmatprep.subr.bf16.mxu0 0
        %1064 = vmatpush1.bf16.msra.mxu0 0
        %1065 = vmatprep.subr.bf16.mxu0 0
        %1066 = vmatpush1.bf16.msra.mxu0 0
        %1067 = vmatprep.subr.bf16.mxu0 0
        %1068 = vmatpush1.bf16.msra.mxu0 0
        %1069 = vmatprep.subr.bf16.mxu0 0
        %1070 = vmatpush1.bf16.msra.mxu0 0
        %1071 = vmatprep.subr.bf16.mxu0 0
        %1072 = vmatpush1.bf16.msra.mxu0 %v1053
        %1073 = vmatprep.subr.bf16.mxu0 0
        %1074 = vmatpush1.bf16.msra.mxu0 %v1052
        %1075 = vmatprep.subr.bf16.mxu0 0
        %1076 = vmatpush2.bf16.msra.mxu0 0
        %1077 = vmatprep.subr.bf16.mxu0 0
        %1078 = vmatpush2.bf16.msra.mxu0 0
        %1079 = vmatprep.subr.bf16.mxu0 0
        %1080 = vmatpush2.bf16.msra.mxu0 0
        %1081 = vmatprep.subr.bf16.mxu0 0
        %1082 = vmatpush2.bf16.msra.mxu0 0
        %1083 = vmatprep.subr.bf16.mxu0 0
        %1084 = vmatpush2.bf16.msra.mxu0 0
        %1085 = vmatprep.subr.bf16.mxu0 0
        %1086 = vmatpush2.bf16.msra.mxu0 0
        %1087 = vmatprep.subr.bf16.mxu0 0
        %1088 = vmatpush2.bf16.msra.mxu0 0
        %1089 = vmatprep.subr.bf16.mxu0 0
        %1090 = vmatpush2.bf16.msra.mxu0 0
        %1091 = vmatprep.mubr.bf16.mxu0 0
        %1092 = vmatmul.mubr.bf16.gmra.mxu0 %v1057
        %v1093 = vpop.f32.mrf.mxu0
        %v1094 = vadd.f32 %v1042, %v1093
        %v1095 = vpop.f32.mrf.mxu0
        %v1096 = vpop.f32.mrf.mxu0
        %v1097 = vpop.f32.mrf.mxu0
        %1098 = vdwg.mxu0
        %v1099 = vmul.f32 %v1094, 0.5
        %v1100 = vmul.f32 %v1094, 0.70710677
        %v1101 = verf.f32.pop %v1100
        %v1102 = vadd.f32 %v1101, 1.0
        %v1103 = vmul.f32 %v1099, %v1102
        %v1104 = vpack.c.bf16 %v1103, %v1103
        %v1105 = vld [vmem:[%s9] sm:$0xf]
        %v1106 = vld [vmem:[%s9 + $0x4] sm:$0xf]
        %v1107 = vld [vmem:[%s9 + $0x8] sm:$0xf]
        %v1108 = vld [vmem:[%s9 + $0xc] sm:$0xf]
        %v1109 = vld [vmem:[%s9 + $0x10] sm:$0xf]
        %v1110 = vld [vmem:[%s9 + $0x14] sm:$0xf]
        %v1111 = vld [vmem:[%s9 + $0x18] sm:$0xf]
        %v1112 = vld [vmem:[%s9 + $0x1c] sm:$0xf]
        %v1113 = vld [vmem:[%s9 + $0x20] sm:$0xf]
        %v1114 = vld [vmem:[%s9 + $0x24] sm:$0xf]
        %v1115 = vld [vmem:[%s9 + $0x28] sm:$0xf]
        %v1116 = vld [vmem:[%s9 + $0x2c] sm:$0xf]
        %v1117 = vld [vmem:[%s9 + $0x30] sm:$0xf]
        %v1118 = vld [vmem:[%s9 + $0x34] sm:$0xf]
        %v1119 = vld [vmem:[%s9 + $0x38] sm:$0xf]
        %v1120 = vld [vmem:[%s9 + $0x3c] sm:$0xf]
        %v1121 = vld [vmem:[%s10] sm:$0x1]
        %v1123 = vlaneseq
        %v1124 = vshrl.u32 %v1123, 7
        %v1125 = vsub.s32 0, %v1124
        %v1126 = vrot.slane %v1121, %v1125
        %v1144 = vunpack.c.l.b16 %v1105
        %v1145 = vunpack.c.l.b16 %v1106
        %v1146 = vunpack.c.l.b16 %v1107
        %v1147 = vunpack.c.l.b16 %v1108
        %v1148 = vunpack.c.l.b16 %v1109
        %v1149 = vunpack.c.l.b16 %v1110
        %v1150 = vunpack.c.l.b16 %v1111
        %v1151 = vunpack.c.l.b16 %v1112
        %v1152 = vunpack.c.l.b16 %v1113
        %v1153 = vunpack.c.l.b16 %v1114
        %v1154 = vunpack.c.l.b16 %v1115
        %v1155 = vunpack.c.l.b16 %v1116
        %v1156 = vunpack.c.l.b16 %v1117
        %v1157 = vunpack.c.l.b16 %v1118
        %v1158 = vunpack.c.l.b16 %v1119
        %v1159 = vunpack.c.l.b16 %v1120
        %v1160 = vpack.c.b16 %v1145, %v1144
        %v1161 = vpack.c.b16 %v1147, %v1146
        %v1162 = vpack.c.b16 %v1149, %v1148
        %v1163 = vpack.c.b16 %v1151, %v1150
        %v1164 = vpack.c.b16 %v1153, %v1152
        %v1165 = vpack.c.b16 %v1155, %v1154
        %v1166 = vpack.c.b16 %v1157, %v1156
        %v1167 = vpack.c.b16 %v1159, %v1158
        %1176 = vmatprep.subr.bf16.mxu0 0
        %1177 = vmatpush1.bf16.msra.mxu0 %v1167
        %1178 = vmatprep.subr.bf16.mxu0 0
        %1179 = vmatpush1.bf16.msra.mxu0 %v1166
        %1180 = vmatprep.subr.bf16.mxu0 0
        %1181 = vmatpush1.bf16.msra.mxu0 %v1165
        %1182 = vmatprep.subr.bf16.mxu0 0
        %1183 = vmatpush1.bf16.msra.mxu0 %v1164
        %1184 = vmatprep.subr.bf16.mxu0 0
        %1185 = vmatpush1.bf16.msra.mxu0 %v1163
        %1186 = vmatprep.subr.bf16.mxu0 0
        %1187 = vmatpush1.bf16.msra.mxu0 %v1162
        %1188 = vmatprep.subr.bf16.mxu0 0
        %1189 = vmatpush1.bf16.msra.mxu0 %v1161
        %1190 = vmatprep.subr.bf16.mxu0 0
        %1191 = vmatpush1.bf16.msra.mxu0 %v1160
        %1192 = vmatprep.subr.bf16.mxu0 0
        %1193 = vmatpush2.bf16.msra.mxu0 0
        %1194 = vmatprep.subr.bf16.mxu0 0
        %1195 = vmatpush2.bf16.msra.mxu0 0
        %1196 = vmatprep.subr.bf16.mxu0 0
        %1197 = vmatpush2.bf16.msra.mxu0 0
        %1198 = vmatprep.subr.bf16.mxu0 0
        %1199 = vmatpush2.bf16.msra.mxu0 0
        %1200 = vmatprep.subr.bf16.mxu0 0
        %1201 = vmatpush2.bf16.msra.mxu0 0
        %1202 = vmatprep.subr.bf16.mxu0 0
        %1203 = vmatpush2.bf16.msra.mxu0 0
        %1204 = vmatprep.subr.bf16.mxu0 0
        %1205 = vmatpush2.bf16.msra.mxu0 0
        %1206 = vmatprep.subr.bf16.mxu0 0
        %1207 = vmatpush2.bf16.msra.mxu0 0
        %1208 = vmatprep.mubr.bf16.mxu0 0
        %1209 = vmatmul.mubr.bf16.gmra.mxu0 %v1104
        %v1210 = vpop.f32.mrf.mxu0
        %v1211 = vadd.f32 %v1126, %v1210
        %v1212 = vpop.f32.mrf.mxu0
        %v1213 = vpop.f32.mrf.mxu0
        %v1214 = vpop.f32.mrf.mxu0
        %1215 = vdwg.mxu0
        %v1216 = vadd.f32 %v1031, %v1211
        %v1217 = vpack.c.bf16 %v1216, %v1216
        %vm1218 = vcmask 257024
        %1219 = vst.msk [vmem:[%s377] sm:$0xf] %vm1218, %v1217
        %s1220 = sand.u32 %s269, 1
        %s1221 = scalar_lea.sflag [#allocation3], %s1220
        %s1222 = sand.u32 %s269, 1
        %s1223 = smul.addr %s1222, 4
        %s1224 = scalar_lea.vmem [#allocation2], %s1223
        // Predicated region
        $region65: #{tpu_custom_call.1} parent=63 // pred_check
          %p1225 = pneg %p279
        $region66: #{tpu_custom_call.1} parent=63 // pred_check_branch
          %1227 = sbr.rel (%p1225) target = $region68
        $region67: #{tpu_custom_call.1} parent=63 // pred_region
          %s1229 = ssub.s32 64, 64
          %1230 = vsyncadd %s1221, %s1229
          %s1231 = smul.addr %s25, 64
          %s1232 = scalar_lea.hbm %s11, %s1231
          %s1234 = sshll.u32 %s1224, 4
          %s1235 = int_to_ptr.vmem [resolvable:$true] %s1234
          %1237 = dma.vmem_to_hbm [thread:$0]  %s1235, 64, %s1232, %s1221
        $region68: #{tpu_custom_call.1} parent=63 // pred_fallthru
          _
      $region64: #{tpu_custom_call.1} parent=5 // pred_fallthru
        _
      %p1238 = scmp.le.s32.totalorder 2, %s20
      // Predicated region
      $region69: #{tpu_custom_call.1} parent=5 // pred_check
        %p1239 = pneg %p1238
      $region70: #{tpu_custom_call.1} parent=5 // pred_check_branch
        %1241 = sbr.rel (%p1239) target = $region72
      $region71: #{tpu_custom_call.1} parent=5 // pred_region
        %s1242 = ssub.s32 %s20, 2
        // Predicated region
        $region73: #{tpu_custom_call.1} parent=71 // pred_check
          %p1243 = pneg %p285
        $region74: #{tpu_custom_call.1} parent=71 // pred_check_branch
          %1245 = sbr.rel (%p1243) target = $region76
        $region75: #{tpu_custom_call.1} parent=71 // pred_region
          %s1246 = sand.u32 %s270, 1
          %s1247 = scalar_lea.sflag [#allocation3], %s1246
          %s1248 = sand.u32 %s270, 1
          %s1249 = smul.addr %s1248, 4
          %s1250 = scalar_lea.vmem [#allocation2], %s1249
          %1251 = dma.done %s1247, 64
        $region76: #{tpu_custom_call.1} parent=71 // pred_fallthru
          _
      $region72: #{tpu_custom_call.1} parent=5 // pred_fallthru
        _
    $region6: #{tpu_custom_call.1} parent=1 // loop_footer
      %s24 = sadd.s32 1, %s20
    $region7: #{tpu_custom_call.1} parent=1 // loop_footer_branch
      %19 = sbr.rel target = $region3
    $region8: #{tpu_custom_call.1} parent=1 // loop_exit
      _
    %1252 = vsyncpa [#allocation3], 1
    %s1253 = scalar_lea.sflag [#allocation3], 1
    %1254 = vsyncpa %s1253, 1

</llo_original>
